<compile_context>
chip_gen: v5e
topology: v5e:2x2
jax: 0.10.0
libtpu: 0.0.40
codegen_flags: <defaults>
</compile_context>

<pallas_src>
import jax
import jax.numpy as jnp
from jax.experimental import pallas as pl
from jax.experimental.pallas import tpu as pltpu

IN_DIM = 32 * 32 * 3   # 3072
H1_DIM = 64
H2_DIM = 32
OUT_DIM = 32 * 32 * 3  # 3072


def mlp_kernel(x_ref, w1_ref, b1_ref, w2_ref, b2_ref, w3_ref, b3_ref, o_ref):
    # Layer 1: (TM, 3072) @ (3072, 64), f32 accumulate, bias + ReLU (dominant matmul).
    h1 = jnp.dot(x_ref[...], w1_ref[...], preferred_element_type=jnp.float32)
    h1 = jnp.maximum(h1 + b1_ref[...], 0.0)
    # Layer 2 (tiny, f32): (TM, 64) @ (64, 32), bias + ReLU. Filler under DMA.
    h2 = jnp.dot(h1, w2_ref[...], preferred_element_type=jnp.float32)
    h2 = jnp.maximum(h2 + b2_ref[...], 0.0)
    # Layer 3: cast activations to the weight dtype (bf16 when streaming bf16)
    # so the MXU runs packed operands; accumulate f32, add f32 bias, store stream dtype.
    out = jnp.dot(h2.astype(w3_ref.dtype), w3_ref[...],
                  preferred_element_type=jnp.float32)
    o_ref[...] = (out + b3_ref[...]).astype(o_ref.dtype)


def _vmem_capacity_bytes():
    """Per-core VMEM capacity; conservative 64 MiB (v7x per-TC) fallback."""
    try:
        cap = int(getattr(pltpu.get_tpu_info(), "vmem_capacity_bytes"))
        if cap > 0:
            return cap
    except Exception:
        pass
    return 64 * 1024 * 1024


def _choose_tm(n, itemsize):
    """Batch tile: keep several pipelined grid steps, cap by VMEM generation."""
    if n < 128:
        return n  # single block; block dims == array dims, no (8,128) rule
    cap = _vmem_capacity_bytes()
    small_vmem = cap < 100 * 1024 * 1024      # v7x: 64 MiB/TC, 2 TensorCores
    tm_cap = 512 if small_vmem else 1024      # v5e/v6e: 128 MiB VMEM
    min_steps = 8 if small_vmem else 4        # several steps per TensorCore
    sub = 16 if itemsize < 4 else 8           # sublane tile for the stream dtype
    tm = (n // min_steps) // sub * sub
    return max(sub, min(tm_cap, tm))


def mlp_forward(x_nchw, params, *, tm=None, stream_dtype=jnp.bfloat16):
    """Fused autoencoder forward.

    x_nchw: (N, 3, 32, 32). Pass it already in `stream_dtype` (default bf16) to
    avoid an extra HBM conversion pass -- the kernel is bandwidth-bound, so
    halving streamed activation bytes is the dominant lever. Returns the
    (N, 3072) reconstruction in `stream_dtype`.
    """
    w1, b1, w2, b2, w3, b3 = params
    n = x_nchw.shape[0]
    # nn.Flatten() on NCHW == row-major reshape (free, no copy).
    x = x_nchw.reshape(n, -1).astype(stream_dtype)
    in_dim = x.shape[1]
    out_dim = w3.shape[1]
    itemsize = jnp.dtype(stream_dtype).itemsize

    # Big-matmul weights follow the stream dtype (packed bf16 on the MXU);
    # biases and the tiny 64x32 layer stay f32.
    w1s = w1.astype(stream_dtype)
    w3s = w3.astype(stream_dtype)

    if tm is None:
        tm = _choose_tm(n, itemsize)
    tm = min(tm, n)
    if tm != n:
        sub = 16 if itemsize < 4 else 8
        assert tm % sub == 0, f"batch tile must be a multiple of {sub} for {stream_dtype}"

    # No jnp.pad: Pallas masks the partial boundary block. Garbage tail rows
    # only flow through row-independent matmul/ReLU into masked-out stores.
    grid = (pl.cdiv(n, tm),)

    # Weights/biases: constant index_map -> DMA'd once, VMEM-resident.
    const = lambda a: pl.BlockSpec(a.shape, lambda i: (0, 0))

    weight_bytes = sum(int(a.size) * int(jnp.dtype(a.dtype).itemsize)
                       for a in (w1s, b1, w2, b2, w3s, b3))
    flops = 2 * n * (in_dim * H1_DIM + H1_DIM * H2_DIM + H2_DIM * out_dim)
    bytes_accessed = n * (in_dim + out_dim) * itemsize + weight_bytes

    # Double-buffered x/out tiles + (padded, double-buffered) weights + headroom,
    # capped at 3/4 of physical VMEM (<= ~48 MiB on v7x, <= 96 MiB on v5e/v6e).
    vmem_need = 2 * tm * (in_dim + out_dim) * itemsize + 4 * weight_bytes + 8 * 2**20
    vmem_limit = int(min(max(vmem_need, 32 * 2**20), _vmem_capacity_bytes() * 3 // 4))

    return pl.pallas_call(
        mlp_kernel,
        out_shape=jax.ShapeDtypeStruct((n, out_dim), stream_dtype),
        grid=grid,
        in_specs=[
            pl.BlockSpec((tm, in_dim), lambda i: (i, 0)),
            const(w1s), const(b1), const(w2), const(b2), const(w3s), const(b3),
        ],
        out_specs=pl.BlockSpec((tm, out_dim), lambda i: (i, 0)),
        compiler_params=pltpu.CompilerParams(
            # Batch rows independent: shard the grid across both v7x TCs.
            dimension_semantics=("parallel",),
            vmem_limit_bytes=vmem_limit,
        ),
        cost_estimate=pl.CostEstimate(
            flops=flops, transcendentals=0, bytes_accessed=bytes_accessed),
    )(x, w1s, b1, w2, b2, w3s, b3)


def init_params(key):
    """PyTorch-Linear-like init (uniform +/- 1/sqrt(fan_in)); weights stored
    transposed as (in_features, out_features)."""
    dims = [(IN_DIM, H1_DIM), (H1_DIM, H2_DIM), (H2_DIM, OUT_DIM)]
    params = []
    for (fan_in, fan_out) in dims:
        key, kw, kb = jax.random.split(key, 3)
        bound = 1.0 / jnp.sqrt(fan_in)
        w = jax.random.uniform(kw, (fan_in, fan_out), jnp.float32, -bound, bound)
        b = jax.random.uniform(kb, (1, fan_out), jnp.float32, -bound, bound)
        params += [w, b]
    return params


def mlp_ref(x_nchw, params):
    """Plain-JAX f32 reference of the PyTorch forward."""
    w1, b1, w2, b2, w3, b3 = params
    x = x_nchw.reshape(x_nchw.shape[0], -1).astype(jnp.float32)
    h = jnp.maximum(x @ w1 + b1, 0.0)
    h = jnp.maximum(h @ w2 + b2, 0.0)
    return h @ w3 + b3


if __name__ == "__main__":
    key = jax.random.PRNGKey(0)
    key, kx1, kx2, kx3 = jax.random.split(key, 4)
    params = init_params(key)

    # 1) Small batch, f32 streams: exact parity with the PyTorch f32 forward
    #    (single-block path).
    x_small = jax.random.normal(kx1, (2, 3, 32, 32), jnp.float32)
    out_f32 = jax.block_until_ready(
        mlp_forward(x_small, params, stream_dtype=jnp.float32))
    ref_f32 = mlp_ref(x_small, params)
    assert out_f32.shape == (2, OUT_DIM) and out_f32.dtype == jnp.float32
    assert jnp.allclose(out_f32, ref_f32, atol=1e-4, rtol=1e-4), "f32 path mismatch"

    # 2) bf16 streams, explicit tile -> multi-step pipeline with a partial
    #    (masked) boundary block (40 = 16 + 16 + 8), no padding pass.
    x_bf16 = jax.random.normal(kx2, (40, 3, 32, 32), jnp.float32).astype(jnp.bfloat16)
    out_bf16 = jax.block_until_ready(mlp_forward(x_bf16, params, tm=16))
    ref_bf16 = mlp_ref(x_bf16, params)
    assert out_bf16.shape == (40, OUT_DIM) and out_bf16.dtype == jnp.bfloat16
    err = float(jnp.max(jnp.abs(out_bf16.astype(jnp.float32) - ref_bf16)))
    scale = float(jnp.max(jnp.abs(ref_bf16))) + 1e-6
    assert err < 0.05 * scale, f"bf16 tiled path mismatch: err={err}, scale={scale}"

    # 3) bf16 streams with the VMEM-aware auto tile chooser.
    x_auto = jax.random.normal(kx3, (160, 3, 32, 32), jnp.float32).astype(jnp.bfloat16)
    out_auto = jax.block_until_ready(mlp_forward(x_auto, params))
    ref_auto = mlp_ref(x_auto, params)
    assert out_auto.shape == (160, OUT_DIM)
    err = float(jnp.max(jnp.abs(out_auto.astype(jnp.float32) - ref_auto)))
    scale = float(jnp.max(jnp.abs(ref_auto))) + 1e-6
    assert err < 0.05 * scale, f"bf16 auto-tile path mismatch: err={err}, scale={scale}"

    print("KERNEL_OK")
</pallas_src>

<mosaic_0001>
module attributes {stable_mosaic.version = 11 : i64} {
  func.func @mlp_kernel(%arg0: i32, %arg1: memref<2x3072xf32, #tpu.memory_space<vmem>>, %arg2: memref<3072x64xf32, #tpu.memory_space<vmem>>, %arg3: memref<1x64xf32, #tpu.memory_space<vmem>>, %arg4: memref<64x32xf32, #tpu.memory_space<vmem>>, %arg5: memref<1x32xf32, #tpu.memory_space<vmem>>, %arg6: memref<32x3072xf32, #tpu.memory_space<vmem>>, %arg7: memref<1x3072xf32, #tpu.memory_space<vmem>>, %arg8: memref<2x3072xf32, #tpu.memory_space<vmem>>) attributes {dimension_semantics = [#tpu.dimension_semantics<parallel>], iteration_bounds = array<i64: 1>, scalar_prefetch = 0 : i64, scratch_operands = 0 : i64, tpu.core_type = #tpu.core_type<tc>, window_params = [{transform_indices = @transform_0, window_bounds = array<i64: 2, 3072>}, {pipeline_mode = #tpu.pipeline_mode<synchronous>, transform_indices = @transform_1, window_bounds = array<i64: 3072, 64>}, {pipeline_mode = #tpu.pipeline_mode<synchronous>, transform_indices = @transform_2, window_bounds = array<i64: 1, 64>}, {pipeline_mode = #tpu.pipeline_mode<synchronous>, transform_indices = @transform_3, window_bounds = array<i64: 64, 32>}, {pipeline_mode = #tpu.pipeline_mode<synchronous>, transform_indices = @transform_4, window_bounds = array<i64: 1, 32>}, {pipeline_mode = #tpu.pipeline_mode<synchronous>, transform_indices = @transform_5, window_bounds = array<i64: 32, 3072>}, {pipeline_mode = #tpu.pipeline_mode<synchronous>, transform_indices = @transform_6, window_bounds = array<i64: 1, 3072>}, {transform_indices = @transform_7, window_bounds = array<i64: 2, 3072>}]} {
    %c0 = arith.constant 0 : index
    %c0_0 = arith.constant 0 : index
    %0 = vector.load %arg1[%c0, %c0_0] : memref<2x3072xf32, #tpu.memory_space<vmem>>, vector<2x3072xf32>
    %c0_1 = arith.constant 0 : index
    %c0_2 = arith.constant 0 : index
    %1 = vector.load %arg2[%c0_1, %c0_2] : memref<3072x64xf32, #tpu.memory_space<vmem>>, vector<3072x64xf32>
    %cst = arith.constant dense<0.000000e+00> : vector<2x64xf32>
    %2 = tpu.matmul %0, %1, %cst {dimension_numbers = #tpu.dot_dimension_numbers<[1], [0], [0], [1], [0, 0, 1, 1], [], []>} : vector<2x3072xf32>, vector<3072x64xf32>, vector<2x64xf32> -> vector<2x64xf32>
    %c0_3 = arith.constant 0 : index
    %c0_4 = arith.constant 0 : index
    %3 = vector.load %arg3[%c0_3, %c0_4] : memref<1x64xf32, #tpu.memory_space<vmem>>, vector<1x64xf32>
    %4 = vector.broadcast %3 : vector<1x64xf32> to vector<2x64xf32>
    %5 = arith.addf %2, %4 : vector<2x64xf32>
    %cst_5 = arith.constant 0.000000e+00 : f32
    %6 = vector.broadcast %cst_5 : f32 to vector<2x64xf32>
    %7 = arith.maximumf %5, %6 : vector<2x64xf32>
    %c0_6 = arith.constant 0 : index
    %c0_7 = arith.constant 0 : index
    %8 = vector.load %arg4[%c0_6, %c0_7] : memref<64x32xf32, #tpu.memory_space<vmem>>, vector<64x32xf32>
    %cst_8 = arith.constant dense<0.000000e+00> : vector<2x32xf32>
    %9 = tpu.matmul %7, %8, %cst_8 {dimension_numbers = #tpu.dot_dimension_numbers<[1], [0], [0], [1], [0, 0, 1, 1], [], []>} : vector<2x64xf32>, vector<64x32xf32>, vector<2x32xf32> -> vector<2x32xf32>
    %c0_9 = arith.constant 0 : index
    %c0_10 = arith.constant 0 : index
    %10 = vector.load %arg5[%c0_9, %c0_10] : memref<1x32xf32, #tpu.memory_space<vmem>>, vector<1x32xf32>
    %11 = vector.broadcast %10 : vector<1x32xf32> to vector<2x32xf32>
    %12 = arith.addf %9, %11 : vector<2x32xf32>
    %cst_11 = arith.constant 0.000000e+00 : f32
    %13 = vector.broadcast %cst_11 : f32 to vector<2x32xf32>
    %14 = arith.maximumf %12, %13 : vector<2x32xf32>
    %c0_12 = arith.constant 0 : index
    %c0_13 = arith.constant 0 : index
    %15 = vector.load %arg6[%c0_12, %c0_13] : memref<32x3072xf32, #tpu.memory_space<vmem>>, vector<32x3072xf32>
    %cst_14 = arith.constant dense<0.000000e+00> : vector<2x3072xf32>
    %16 = tpu.matmul %14, %15, %cst_14 {dimension_numbers = #tpu.dot_dimension_numbers<[1], [0], [0], [1], [0, 0, 1, 1], [], []>} : vector<2x32xf32>, vector<32x3072xf32>, vector<2x3072xf32> -> vector<2x3072xf32>
    %c0_15 = arith.constant 0 : index
    %c0_16 = arith.constant 0 : index
    %17 = vector.load %arg7[%c0_15, %c0_16] : memref<1x3072xf32, #tpu.memory_space<vmem>>, vector<1x3072xf32>
    %18 = vector.broadcast %17 : vector<1x3072xf32> to vector<2x3072xf32>
    %19 = arith.addf %16, %18 : vector<2x3072xf32>
    %c0_17 = arith.constant 0 : index
    %c0_18 = arith.constant 0 : index
    %20 = vector.load %arg8[%c0_17, %c0_18] : memref<2x3072xf32, #tpu.memory_space<vmem>>, vector<2x3072xf32>
    tpu.vector_store %arg8[%c0_17, %c0_18], %19 {strides = array<i32>} : memref<2x3072xf32, #tpu.memory_space<vmem>>, vector<2x3072xf32>,
    return
  }
  func.func @transform_0(%arg0: i32) -> (i32, i32) {
    %c0_i32 = arith.constant 0 : i32
    %c0_i32_0 = arith.constant 0 : i32
    return %arg0, %c0_i32 : i32, i32
  }
  func.func @transform_1(%arg0: i32) -> (i32, i32) {
    %c0_i32 = arith.constant 0 : i32
    %c0_i32_0 = arith.constant 0 : i32
    %c0_i32_1 = arith.constant 0 : i32
    return %c0_i32, %c0_i32_0 : i32, i32
  }
  func.func @transform_2(%arg0: i32) -> (i32, i32) {
    %c0_i32 = arith.constant 0 : i32
    %c0_i32_0 = arith.constant 0 : i32
    %c0_i32_1 = arith.constant 0 : i32
    return %c0_i32, %c0_i32_0 : i32, i32
  }
  func.func @transform_3(%arg0: i32) -> (i32, i32) {
    %c0_i32 = arith.constant 0 : i32
    %c0_i32_0 = arith.constant 0 : i32
    %c0_i32_1 = arith.constant 0 : i32
    return %c0_i32, %c0_i32_0 : i32, i32
  }
  func.func @transform_4(%arg0: i32) -> (i32, i32) {
    %c0_i32 = arith.constant 0 : i32
    %c0_i32_0 = arith.constant 0 : i32
    %c0_i32_1 = arith.constant 0 : i32
    return %c0_i32, %c0_i32_0 : i32, i32
  }
  func.func @transform_5(%arg0: i32) -> (i32, i32) {
    %c0_i32 = arith.constant 0 : i32
    %c0_i32_0 = arith.constant 0 : i32
    %c0_i32_1 = arith.constant 0 : i32
    return %c0_i32, %c0_i32_0 : i32, i32
  }
  func.func @transform_6(%arg0: i32) -> (i32, i32) {
    %c0_i32 = arith.constant 0 : i32
    %c0_i32_0 = arith.constant 0 : i32
    %c0_i32_1 = arith.constant 0 : i32
    return %c0_i32, %c0_i32_0 : i32, i32
  }
  func.func @transform_7(%arg0: i32) -> (i32, i32) {
    %c0_i32 = arith.constant 0 : i32
    %c0_i32_0 = arith.constant 0 : i32
    return %arg0, %c0_i32 : i32, i32
  }
}

</mosaic_0001>

<llo_original>
// kernel: tpu_custom_call.1
$region0: #{tpu_custom_call.1}
  #allocation0 [shape = 'u32[]', space=smem, size = 0x4, offset = 0x4, fixed_abs, tag = 'smem constant byte address 0x4 - core index']
  #allocation1 [shape = 'u32[72,128]{1,0:T(1,128)}', space=vmem, size = 0x9000, scoped, tag = 'internal scratch']
  %s0 = inlined_call_operand.vmem [shape: f32[2,3072], index: 0, kind: input, shape index: {}]
  %s1 = inlined_call_operand.vmem [shape: f32[3072,64], index: 1, kind: input, shape index: {}]
  %s2 = inlined_call_operand.vmem [shape: f32[1,64], index: 2, kind: input, shape index: {}]
  %s3 = inlined_call_operand.vmem [shape: f32[64,32], index: 3, kind: input, shape index: {}]
  %s4 = inlined_call_operand.vmem [shape: f32[1,32], index: 4, kind: input, shape index: {}]
  %s5 = inlined_call_operand.vmem [shape: f32[32,3072], index: 5, kind: input, shape index: {}]
  %s6 = inlined_call_operand.vmem [shape: f32[1,3072], index: 6, kind: input, shape index: {}]
  %s7 = inlined_call_operand.hbm [shape: f32[2,3072], index: 7, kind: output, shape index: {}]
  %s8 = sld [smem:[#allocation0]]
  $region38: #{tpu_custom_call.1} parent=0
    _
  %s10 = ssub.s32 1, %s8
  %s11 = scalar_select 0, %s10, %s8
  $region1: #{tpu_custom_call.1} parent=0
    #allocation2 [shape = 'u8[24576]{0}', space=vmem, size = 0x6000, scoped, tag = 'output window, operand 0, single buffered']
    #allocation3 [shape = 's32[1]{0}', space=sflag, size = 0x4, scoped, tag = 'scoped memory for tpu_custom_call.1']
    %12 = vsyncpa [#allocation3], 0
    // Predicated region
    $region2: #{tpu_custom_call.1} parent=1 // pred_check
      _
    $region3: #{tpu_custom_call.1} parent=1 // pred_check_branch
      %14 = sbr.rel (0) target = $region5
    $region4: #{tpu_custom_call.1} parent=1 // pred_region
      _
    $region5: #{tpu_custom_call.1} parent=1 // pred_fallthru
      _
    // Predicated region
    $region6: #{tpu_custom_call.1} parent=1 // pred_check
      _
    $region7: #{tpu_custom_call.1} parent=1 // pred_check_branch
      %16 = sbr.rel (0) target = $region9
    $region8: #{tpu_custom_call.1} parent=1 // pred_region
      _
    $region9: #{tpu_custom_call.1} parent=1 // pred_fallthru
      _
    // Predicated region
    $region10: #{tpu_custom_call.1} parent=1 // pred_check
      _
    $region11: #{tpu_custom_call.1} parent=1 // pred_check_branch
      %18 = sbr.rel (0) target = $region13
    $region12: #{tpu_custom_call.1} parent=1 // pred_region
      _
    $region13: #{tpu_custom_call.1} parent=1 // pred_fallthru
      _
    // Predicated region
    $region14: #{tpu_custom_call.1} parent=1 // pred_check
      _
    $region15: #{tpu_custom_call.1} parent=1 // pred_check_branch
      %20 = sbr.rel (0) target = $region17
    $region16: #{tpu_custom_call.1} parent=1 // pred_region
      _
    $region17: #{tpu_custom_call.1} parent=1 // pred_fallthru
      _
    // Predicated region
    $region18: #{tpu_custom_call.1} parent=1 // pred_check
      _
    $region19: #{tpu_custom_call.1} parent=1 // pred_check_branch
      %22 = sbr.rel (0) target = $region21
    $region20: #{tpu_custom_call.1} parent=1 // pred_region
      _
    $region21: #{tpu_custom_call.1} parent=1 // pred_fallthru
      _
    // Predicated region
    $region22: #{tpu_custom_call.1} parent=1 // pred_check
      _
    $region23: #{tpu_custom_call.1} parent=1 // pred_check_branch
      %24 = sbr.rel (0) target = $region25
    $region24: #{tpu_custom_call.1} parent=1 // pred_region
      _
    $region25: #{tpu_custom_call.1} parent=1 // pred_fallthru
      _
    // Predicated region
    $region26: #{tpu_custom_call.1} parent=1 // pred_check
      _
    $region27: #{tpu_custom_call.1} parent=1 // pred_check_branch
      %26 = sbr.rel (0) target = $region29
    $region28: #{tpu_custom_call.1} parent=1 // pred_region
      _
    $region29: #{tpu_custom_call.1} parent=1 // pred_fallthru
      _
    %v27 = vld [vmem:[%s0] sm:$0xff]
    %v28 = vld [vmem:[%s0 + $0x8] sm:$0xff]
    %v29 = vld [vmem:[%s0 + $0x10] sm:$0xff]
    %v30 = vld [vmem:[%s0 + $0x18] sm:$0xff]
    %v31 = vld [vmem:[%s0 + $0x20] sm:$0xff]
    %v32 = vld [vmem:[%s0 + $0x28] sm:$0xff]
    %v33 = vld [vmem:[%s1] sm:$0xff]
    %v34 = vld [vmem:[%s1 + $0x8] sm:$0xff]
    %v35 = vld [vmem:[%s1 + $0x10] sm:$0xff]
    %v36 = vld [vmem:[%s1 + $0x18] sm:$0xff]
    %v37 = vld [vmem:[%s1 + $0x20] sm:$0xff]
    %v38 = vld [vmem:[%s1 + $0x28] sm:$0xff]
    %v39 = vld [vmem:[%s1 + $0x30] sm:$0xff]
    %v40 = vld [vmem:[%s1 + $0x38] sm:$0xff]
    %v41 = vld [vmem:[%s1 + $0x40] sm:$0xff]
    %v42 = vld [vmem:[%s1 + $0x48] sm:$0xff]
    %v43 = vld [vmem:[%s1 + $0x50] sm:$0xff]
    %v44 = vld [vmem:[%s1 + $0x58] sm:$0xff]
    %v45 = vld [vmem:[%s1 + $0x60] sm:$0xff]
    %v46 = vld [vmem:[%s1 + $0x68] sm:$0xff]
    %v47 = vld [vmem:[%s1 + $0x70] sm:$0xff]
    %v48 = vld [vmem:[%s1 + $0x78] sm:$0xff]
    %v49 = vld [vmem:[%s1 + $0x80] sm:$0xff]
    %v50 = vld [vmem:[%s1 + $0x88] sm:$0xff]
    %v51 = vld [vmem:[%s1 + $0x90] sm:$0xff]
    %v52 = vld [vmem:[%s1 + $0x98] sm:$0xff]
    %v53 = vld [vmem:[%s1 + $0xa0] sm:$0xff]
    %v54 = vld [vmem:[%s1 + $0xa8] sm:$0xff]
    %v55 = vld [vmem:[%s1 + $0xb0] sm:$0xff]
    %v56 = vld [vmem:[%s1 + $0xb8] sm:$0xff]
    %v57 = vld [vmem:[%s1 + $0xc0] sm:$0xff]
    %v58 = vld [vmem:[%s1 + $0xc8] sm:$0xff]
    %v59 = vld [vmem:[%s1 + $0xd0] sm:$0xff]
    %v60 = vld [vmem:[%s1 + $0xd8] sm:$0xff]
    %v61 = vld [vmem:[%s1 + $0xe0] sm:$0xff]
    %v62 = vld [vmem:[%s1 + $0xe8] sm:$0xff]
    %v63 = vld [vmem:[%s1 + $0xf0] sm:$0xff]
    %v64 = vld [vmem:[%s1 + $0xf8] sm:$0xff]
    %v65 = vld [vmem:[%s1 + $0x100] sm:$0xff]
    %v66 = vld [vmem:[%s1 + $0x108] sm:$0xff]
    %v67 = vld [vmem:[%s1 + $0x110] sm:$0xff]
    %v68 = vld [vmem:[%s1 + $0x118] sm:$0xff]
    %v69 = vld [vmem:[%s1 + $0x120] sm:$0xff]
    %v70 = vld [vmem:[%s1 + $0x128] sm:$0xff]
    %v71 = vld [vmem:[%s1 + $0x130] sm:$0xff]
    %v72 = vld [vmem:[%s1 + $0x138] sm:$0xff]
    %v73 = vld [vmem:[%s1 + $0x140] sm:$0xff]
    %v74 = vld [vmem:[%s1 + $0x148] sm:$0xff]
    %v75 = vld [vmem:[%s1 + $0x150] sm:$0xff]
    %v76 = vld [vmem:[%s1 + $0x158] sm:$0xff]
    %v77 = vld [vmem:[%s1 + $0x160] sm:$0xff]
    %v78 = vld [vmem:[%s1 + $0x168] sm:$0xff]
    %v79 = vld [vmem:[%s1 + $0x170] sm:$0xff]
    %v80 = vld [vmem:[%s1 + $0x178] sm:$0xff]
    %v81 = vld [vmem:[%s1 + $0x180] sm:$0xff]
    %v82 = vld [vmem:[%s1 + $0x188] sm:$0xff]
    %v83 = vld [vmem:[%s1 + $0x190] sm:$0xff]
    %v84 = vld [vmem:[%s1 + $0x198] sm:$0xff]
    %v85 = vld [vmem:[%s1 + $0x1a0] sm:$0xff]
    %v86 = vld [vmem:[%s1 + $0x1a8] sm:$0xff]
    %v87 = vld [vmem:[%s1 + $0x1b0] sm:$0xff]
    %v88 = vld [vmem:[%s1 + $0x1b8] sm:$0xff]
    %v89 = vld [vmem:[%s1 + $0x1c0] sm:$0xff]
    %v90 = vld [vmem:[%s1 + $0x1c8] sm:$0xff]
    %v91 = vld [vmem:[%s1 + $0x1d0] sm:$0xff]
    %v92 = vld [vmem:[%s1 + $0x1d8] sm:$0xff]
    %v93 = vld [vmem:[%s1 + $0x1e0] sm:$0xff]
    %v94 = vld [vmem:[%s1 + $0x1e8] sm:$0xff]
    %v95 = vld [vmem:[%s1 + $0x1f0] sm:$0xff]
    %v96 = vld [vmem:[%s1 + $0x1f8] sm:$0xff]
    %v97 = vld [vmem:[%s1 + $0x200] sm:$0xff]
    %v98 = vld [vmem:[%s1 + $0x208] sm:$0xff]
    %v99 = vld [vmem:[%s1 + $0x210] sm:$0xff]
    %v100 = vld [vmem:[%s1 + $0x218] sm:$0xff]
    %v101 = vld [vmem:[%s1 + $0x220] sm:$0xff]
    %v102 = vld [vmem:[%s1 + $0x228] sm:$0xff]
    %v103 = vld [vmem:[%s1 + $0x230] sm:$0xff]
    %v104 = vld [vmem:[%s1 + $0x238] sm:$0xff]
    %v105 = vld [vmem:[%s1 + $0x240] sm:$0xff]
    %v106 = vld [vmem:[%s1 + $0x248] sm:$0xff]
    %v107 = vld [vmem:[%s1 + $0x250] sm:$0xff]
    %v108 = vld [vmem:[%s1 + $0x258] sm:$0xff]
    %v109 = vld [vmem:[%s1 + $0x260] sm:$0xff]
    %v110 = vld [vmem:[%s1 + $0x268] sm:$0xff]
    %v111 = vld [vmem:[%s1 + $0x270] sm:$0xff]
    %v112 = vld [vmem:[%s1 + $0x278] sm:$0xff]
    %v113 = vld [vmem:[%s1 + $0x280] sm:$0xff]
    %v114 = vld [vmem:[%s1 + $0x288] sm:$0xff]
    %v115 = vld [vmem:[%s1 + $0x290] sm:$0xff]
    %v116 = vld [vmem:[%s1 + $0x298] sm:$0xff]
    %v117 = vld [vmem:[%s1 + $0x2a0] sm:$0xff]
    %v118 = vld [vmem:[%s1 + $0x2a8] sm:$0xff]
    %v119 = vld [vmem:[%s1 + $0x2b0] sm:$0xff]
    %v120 = vld [vmem:[%s1 + $0x2b8] sm:$0xff]
    %v121 = vld [vmem:[%s1 + $0x2c0] sm:$0xff]
    %v122 = vld [vmem:[%s1 + $0x2c8] sm:$0xff]
    %v123 = vld [vmem:[%s1 + $0x2d0] sm:$0xff]
    %v124 = vld [vmem:[%s1 + $0x2d8] sm:$0xff]
    %v125 = vld [vmem:[%s1 + $0x2e0] sm:$0xff]
    %v126 = vld [vmem:[%s1 + $0x2e8] sm:$0xff]
    %v127 = vld [vmem:[%s1 + $0x2f0] sm:$0xff]
    %v128 = vld [vmem:[%s1 + $0x2f8] sm:$0xff]
    %v129 = vld [vmem:[%s1 + $0x300] sm:$0xff]
    %v130 = vld [vmem:[%s1 + $0x308] sm:$0xff]
    %v131 = vld [vmem:[%s1 + $0x310] sm:$0xff]
    %v132 = vld [vmem:[%s1 + $0x318] sm:$0xff]
    %v133 = vld [vmem:[%s1 + $0x320] sm:$0xff]
    %v134 = vld [vmem:[%s1 + $0x328] sm:$0xff]
    %v135 = vld [vmem:[%s1 + $0x330] sm:$0xff]
    %v136 = vld [vmem:[%s1 + $0x338] sm:$0xff]
    %v137 = vld [vmem:[%s1 + $0x340] sm:$0xff]
    %v138 = vld [vmem:[%s1 + $0x348] sm:$0xff]
    %v139 = vld [vmem:[%s1 + $0x350] sm:$0xff]
    %v140 = vld [vmem:[%s1 + $0x358] sm:$0xff]
    %v141 = vld [vmem:[%s1 + $0x360] sm:$0xff]
    %v142 = vld [vmem:[%s1 + $0x368] sm:$0xff]
    %v143 = vld [vmem:[%s1 + $0x370] sm:$0xff]
    %v144 = vld [vmem:[%s1 + $0x378] sm:$0xff]
    %v145 = vld [vmem:[%s1 + $0x380] sm:$0xff]
    %v146 = vld [vmem:[%s1 + $0x388] sm:$0xff]
    %v147 = vld [vmem:[%s1 + $0x390] sm:$0xff]
    %v148 = vld [vmem:[%s1 + $0x398] sm:$0xff]
    %v149 = vld [vmem:[%s1 + $0x3a0] sm:$0xff]
    %v150 = vld [vmem:[%s1 + $0x3a8] sm:$0xff]
    %v151 = vld [vmem:[%s1 + $0x3b0] sm:$0xff]
    %v152 = vld [vmem:[%s1 + $0x3b8] sm:$0xff]
    %v153 = vld [vmem:[%s1 + $0x3c0] sm:$0xff]
    %v154 = vld [vmem:[%s1 + $0x3c8] sm:$0xff]
    %v155 = vld [vmem:[%s1 + $0x3d0] sm:$0xff]
    %v156 = vld [vmem:[%s1 + $0x3d8] sm:$0xff]
    %v157 = vld [vmem:[%s1 + $0x3e0] sm:$0xff]
    %v158 = vld [vmem:[%s1 + $0x3e8] sm:$0xff]
    %v159 = vld [vmem:[%s1 + $0x3f0] sm:$0xff]
    %v160 = vld [vmem:[%s1 + $0x3f8] sm:$0xff]
    %v161 = vld [vmem:[%s1 + $0x400] sm:$0xff]
    %v162 = vld [vmem:[%s1 + $0x408] sm:$0xff]
    %v163 = vld [vmem:[%s1 + $0x410] sm:$0xff]
    %v164 = vld [vmem:[%s1 + $0x418] sm:$0xff]
    %v165 = vld [vmem:[%s1 + $0x420] sm:$0xff]
    %v166 = vld [vmem:[%s1 + $0x428] sm:$0xff]
    %v167 = vld [vmem:[%s1 + $0x430] sm:$0xff]
    %v168 = vld [vmem:[%s1 + $0x438] sm:$0xff]
    %v169 = vld [vmem:[%s1 + $0x440] sm:$0xff]
    %v170 = vld [vmem:[%s1 + $0x448] sm:$0xff]
    %v171 = vld [vmem:[%s1 + $0x450] sm:$0xff]
    %v172 = vld [vmem:[%s1 + $0x458] sm:$0xff]
    %v173 = vld [vmem:[%s1 + $0x460] sm:$0xff]
    %v174 = vld [vmem:[%s1 + $0x468] sm:$0xff]
    %v175 = vld [vmem:[%s1 + $0x470] sm:$0xff]
    %v176 = vld [vmem:[%s1 + $0x478] sm:$0xff]
    %v177 = vld [vmem:[%s1 + $0x480] sm:$0xff]
    %v178 = vld [vmem:[%s1 + $0x488] sm:$0xff]
    %v179 = vld [vmem:[%s1 + $0x490] sm:$0xff]
    %v180 = vld [vmem:[%s1 + $0x498] sm:$0xff]
    %v181 = vld [vmem:[%s1 + $0x4a0] sm:$0xff]
    %v182 = vld [vmem:[%s1 + $0x4a8] sm:$0xff]
    %v183 = vld [vmem:[%s1 + $0x4b0] sm:$0xff]
    %v184 = vld [vmem:[%s1 + $0x4b8] sm:$0xff]
    %v185 = vld [vmem:[%s1 + $0x4c0] sm:$0xff]
    %v186 = vld [vmem:[%s1 + $0x4c8] sm:$0xff]
    %v187 = vld [vmem:[%s1 + $0x4d0] sm:$0xff]
    %v188 = vld [vmem:[%s1 + $0x4d8] sm:$0xff]
    %v189 = vld [vmem:[%s1 + $0x4e0] sm:$0xff]
    %v190 = vld [vmem:[%s1 + $0x4e8] sm:$0xff]
    %v191 = vld [vmem:[%s1 + $0x4f0] sm:$0xff]
    %v192 = vld [vmem:[%s1 + $0x4f8] sm:$0xff]
    %v193 = vld [vmem:[%s1 + $0x500] sm:$0xff]
    %v194 = vld [vmem:[%s1 + $0x508] sm:$0xff]
    %v195 = vld [vmem:[%s1 + $0x510] sm:$0xff]
    %v196 = vld [vmem:[%s1 + $0x518] sm:$0xff]
    %v197 = vld [vmem:[%s1 + $0x520] sm:$0xff]
    %v198 = vld [vmem:[%s1 + $0x528] sm:$0xff]
    %v199 = vld [vmem:[%s1 + $0x530] sm:$0xff]
    %v200 = vld [vmem:[%s1 + $0x538] sm:$0xff]
    %v201 = vld [vmem:[%s1 + $0x540] sm:$0xff]
    %v202 = vld [vmem:[%s1 + $0x548] sm:$0xff]
    %v203 = vld [vmem:[%s1 + $0x550] sm:$0xff]
    %v204 = vld [vmem:[%s1 + $0x558] sm:$0xff]
    %v205 = vld [vmem:[%s1 + $0x560] sm:$0xff]
    %v206 = vld [vmem:[%s1 + $0x568] sm:$0xff]
    %v207 = vld [vmem:[%s1 + $0x570] sm:$0xff]
    %v208 = vld [vmem:[%s1 + $0x578] sm:$0xff]
    %v209 = vld [vmem:[%s1 + $0x580] sm:$0xff]
    %v210 = vld [vmem:[%s1 + $0x588] sm:$0xff]
    %v211 = vld [vmem:[%s1 + $0x590] sm:$0xff]
    %v212 = vld [vmem:[%s1 + $0x598] sm:$0xff]
    %v213 = vld [vmem:[%s1 + $0x5a0] sm:$0xff]
    %v214 = vld [vmem:[%s1 + $0x5a8] sm:$0xff]
    %v215 = vld [vmem:[%s1 + $0x5b0] sm:$0xff]
    %v216 = vld [vmem:[%s1 + $0x5b8] sm:$0xff]
    %v217 = vld [vmem:[%s1 + $0x5c0] sm:$0xff]
    %v218 = vld [vmem:[%s1 + $0x5c8] sm:$0xff]
    %v219 = vld [vmem:[%s1 + $0x5d0] sm:$0xff]
    %v220 = vld [vmem:[%s1 + $0x5d8] sm:$0xff]
    %v221 = vld [vmem:[%s1 + $0x5e0] sm:$0xff]
    %v222 = vld [vmem:[%s1 + $0x5e8] sm:$0xff]
    %v223 = vld [vmem:[%s1 + $0x5f0] sm:$0xff]
    %v224 = vld [vmem:[%s1 + $0x5f8] sm:$0xff]
    %v225 = vld [vmem:[%s1 + $0x600] sm:$0xff]
    %v226 = vld [vmem:[%s1 + $0x608] sm:$0xff]
    %v227 = vld [vmem:[%s1 + $0x610] sm:$0xff]
    %v228 = vld [vmem:[%s1 + $0x618] sm:$0xff]
    %v229 = vld [vmem:[%s1 + $0x620] sm:$0xff]
    %v230 = vld [vmem:[%s1 + $0x628] sm:$0xff]
    %v231 = vld [vmem:[%s1 + $0x630] sm:$0xff]
    %v232 = vld [vmem:[%s1 + $0x638] sm:$0xff]
    %v233 = vld [vmem:[%s1 + $0x640] sm:$0xff]
    %v234 = vld [vmem:[%s1 + $0x648] sm:$0xff]
    %v235 = vld [vmem:[%s1 + $0x650] sm:$0xff]
    %v236 = vld [vmem:[%s1 + $0x658] sm:$0xff]
    %v237 = vld [vmem:[%s1 + $0x660] sm:$0xff]
    %v238 = vld [vmem:[%s1 + $0x668] sm:$0xff]
    %v239 = vld [vmem:[%s1 + $0x670] sm:$0xff]
    %v240 = vld [vmem:[%s1 + $0x678] sm:$0xff]
    %v241 = vld [vmem:[%s1 + $0x680] sm:$0xff]
    %v242 = vld [vmem:[%s1 + $0x688] sm:$0xff]
    %v243 = vld [vmem:[%s1 + $0x690] sm:$0xff]
    %v244 = vld [vmem:[%s1 + $0x698] sm:$0xff]
    %v245 = vld [vmem:[%s1 + $0x6a0] sm:$0xff]
    %v246 = vld [vmem:[%s1 + $0x6a8] sm:$0xff]
    %v247 = vld [vmem:[%s1 + $0x6b0] sm:$0xff]
    %v248 = vld [vmem:[%s1 + $0x6b8] sm:$0xff]
    %v249 = vld [vmem:[%s1 + $0x6c0] sm:$0xff]
    %v250 = vld [vmem:[%s1 + $0x6c8] sm:$0xff]
    %v251 = vld [vmem:[%s1 + $0x6d0] sm:$0xff]
    %v252 = vld [vmem:[%s1 + $0x6d8] sm:$0xff]
    %v253 = vld [vmem:[%s1 + $0x6e0] sm:$0xff]
    %v254 = vld [vmem:[%s1 + $0x6e8] sm:$0xff]
    %v255 = vld [vmem:[%s1 + $0x6f0] sm:$0xff]
    %v256 = vld [vmem:[%s1 + $0x6f8] sm:$0xff]
    %v257 = vld [vmem:[%s1 + $0x700] sm:$0xff]
    %v258 = vld [vmem:[%s1 + $0x708] sm:$0xff]
    %v259 = vld [vmem:[%s1 + $0x710] sm:$0xff]
    %v260 = vld [vmem:[%s1 + $0x718] sm:$0xff]
    %v261 = vld [vmem:[%s1 + $0x720] sm:$0xff]
    %v262 = vld [vmem:[%s1 + $0x728] sm:$0xff]
    %v263 = vld [vmem:[%s1 + $0x730] sm:$0xff]
    %v264 = vld [vmem:[%s1 + $0x738] sm:$0xff]
    %v265 = vld [vmem:[%s1 + $0x740] sm:$0xff]
    %v266 = vld [vmem:[%s1 + $0x748] sm:$0xff]
    %v267 = vld [vmem:[%s1 + $0x750] sm:$0xff]
    %v268 = vld [vmem:[%s1 + $0x758] sm:$0xff]
    %v269 = vld [vmem:[%s1 + $0x760] sm:$0xff]
    %v270 = vld [vmem:[%s1 + $0x768] sm:$0xff]
    %v271 = vld [vmem:[%s1 + $0x770] sm:$0xff]
    %v272 = vld [vmem:[%s1 + $0x778] sm:$0xff]
    %v273 = vld [vmem:[%s1 + $0x780] sm:$0xff]
    %v274 = vld [vmem:[%s1 + $0x788] sm:$0xff]
    %v275 = vld [vmem:[%s1 + $0x790] sm:$0xff]
    %v276 = vld [vmem:[%s1 + $0x798] sm:$0xff]
    %v277 = vld [vmem:[%s1 + $0x7a0] sm:$0xff]
    %v278 = vld [vmem:[%s1 + $0x7a8] sm:$0xff]
    %v279 = vld [vmem:[%s1 + $0x7b0] sm:$0xff]
    %v280 = vld [vmem:[%s1 + $0x7b8] sm:$0xff]
    %v281 = vld [vmem:[%s1 + $0x7c0] sm:$0xff]
    %v282 = vld [vmem:[%s1 + $0x7c8] sm:$0xff]
    %v283 = vld [vmem:[%s1 + $0x7d0] sm:$0xff]
    %v284 = vld [vmem:[%s1 + $0x7d8] sm:$0xff]
    %v285 = vld [vmem:[%s1 + $0x7e0] sm:$0xff]
    %v286 = vld [vmem:[%s1 + $0x7e8] sm:$0xff]
    %v287 = vld [vmem:[%s1 + $0x7f0] sm:$0xff]
    %v288 = vld [vmem:[%s1 + $0x7f8] sm:$0xff]
    %v289 = vld [vmem:[%s1 + $0x800] sm:$0xff]
    %v290 = vld [vmem:[%s1 + $0x808] sm:$0xff]
    %v291 = vld [vmem:[%s1 + $0x810] sm:$0xff]
    %v292 = vld [vmem:[%s1 + $0x818] sm:$0xff]
    %v293 = vld [vmem:[%s1 + $0x820] sm:$0xff]
    %v294 = vld [vmem:[%s1 + $0x828] sm:$0xff]
    %v295 = vld [vmem:[%s1 + $0x830] sm:$0xff]
    %v296 = vld [vmem:[%s1 + $0x838] sm:$0xff]
    %v297 = vld [vmem:[%s1 + $0x840] sm:$0xff]
    %v298 = vld [vmem:[%s1 + $0x848] sm:$0xff]
    %v299 = vld [vmem:[%s1 + $0x850] sm:$0xff]
    %v300 = vld [vmem:[%s1 + $0x858] sm:$0xff]
    %v301 = vld [vmem:[%s1 + $0x860] sm:$0xff]
    %v302 = vld [vmem:[%s1 + $0x868] sm:$0xff]
    %v303 = vld [vmem:[%s1 + $0x870] sm:$0xff]
    %v304 = vld [vmem:[%s1 + $0x878] sm:$0xff]
    %v305 = vld [vmem:[%s1 + $0x880] sm:$0xff]
    %v306 = vld [vmem:[%s1 + $0x888] sm:$0xff]
    %v307 = vld [vmem:[%s1 + $0x890] sm:$0xff]
    %v308 = vld [vmem:[%s1 + $0x898] sm:$0xff]
    %v309 = vld [vmem:[%s1 + $0x8a0] sm:$0xff]
    %v310 = vld [vmem:[%s1 + $0x8a8] sm:$0xff]
    %v311 = vld [vmem:[%s1 + $0x8b0] sm:$0xff]
    %v312 = vld [vmem:[%s1 + $0x8b8] sm:$0xff]
    %v313 = vld [vmem:[%s1 + $0x8c0] sm:$0xff]
    %v314 = vld [vmem:[%s1 + $0x8c8] sm:$0xff]
    %v315 = vld [vmem:[%s1 + $0x8d0] sm:$0xff]
    %v316 = vld [vmem:[%s1 + $0x8d8] sm:$0xff]
    %v317 = vld [vmem:[%s1 + $0x8e0] sm:$0xff]
    %v318 = vld [vmem:[%s1 + $0x8e8] sm:$0xff]
    %v319 = vld [vmem:[%s1 + $0x8f0] sm:$0xff]
    %v320 = vld [vmem:[%s1 + $0x8f8] sm:$0xff]
    %v321 = vld [vmem:[%s1 + $0x900] sm:$0xff]
    %v322 = vld [vmem:[%s1 + $0x908] sm:$0xff]
    %v323 = vld [vmem:[%s1 + $0x910] sm:$0xff]
    %v324 = vld [vmem:[%s1 + $0x918] sm:$0xff]
    %v325 = vld [vmem:[%s1 + $0x920] sm:$0xff]
    %v326 = vld [vmem:[%s1 + $0x928] sm:$0xff]
    %v327 = vld [vmem:[%s1 + $0x930] sm:$0xff]
    %v328 = vld [vmem:[%s1 + $0x938] sm:$0xff]
    %v329 = vld [vmem:[%s1 + $0x940] sm:$0xff]
    %v330 = vld [vmem:[%s1 + $0x948] sm:$0xff]
    %v331 = vld [vmem:[%s1 + $0x950] sm:$0xff]
    %v332 = vld [vmem:[%s1 + $0x958] sm:$0xff]
    %v333 = vld [vmem:[%s1 + $0x960] sm:$0xff]
    %v334 = vld [vmem:[%s1 + $0x968] sm:$0xff]
    %v335 = vld [vmem:[%s1 + $0x970] sm:$0xff]
    %v336 = vld [vmem:[%s1 + $0x978] sm:$0xff]
    %v337 = vld [vmem:[%s1 + $0x980] sm:$0xff]
    %v338 = vld [vmem:[%s1 + $0x988] sm:$0xff]
    %v339 = vld [vmem:[%s1 + $0x990] sm:$0xff]
    %v340 = vld [vmem:[%s1 + $0x998] sm:$0xff]
    %v341 = vld [vmem:[%s1 + $0x9a0] sm:$0xff]
    %v342 = vld [vmem:[%s1 + $0x9a8] sm:$0xff]
    %v343 = vld [vmem:[%s1 + $0x9b0] sm:$0xff]
    %v344 = vld [vmem:[%s1 + $0x9b8] sm:$0xff]
    %v345 = vld [vmem:[%s1 + $0x9c0] sm:$0xff]
    %v346 = vld [vmem:[%s1 + $0x9c8] sm:$0xff]
    %v347 = vld [vmem:[%s1 + $0x9d0] sm:$0xff]
    %v348 = vld [vmem:[%s1 + $0x9d8] sm:$0xff]
    %v349 = vld [vmem:[%s1 + $0x9e0] sm:$0xff]
    %v350 = vld [vmem:[%s1 + $0x9e8] sm:$0xff]
    %v351 = vld [vmem:[%s1 + $0x9f0] sm:$0xff]
    %v352 = vld [vmem:[%s1 + $0x9f8] sm:$0xff]
    %v353 = vld [vmem:[%s1 + $0xa00] sm:$0xff]
    %v354 = vld [vmem:[%s1 + $0xa08] sm:$0xff]
    %v355 = vld [vmem:[%s1 + $0xa10] sm:$0xff]
    %v356 = vld [vmem:[%s1 + $0xa18] sm:$0xff]
    %v357 = vld [vmem:[%s1 + $0xa20] sm:$0xff]
    %v358 = vld [vmem:[%s1 + $0xa28] sm:$0xff]
    %v359 = vld [vmem:[%s1 + $0xa30] sm:$0xff]
    %v360 = vld [vmem:[%s1 + $0xa38] sm:$0xff]
    %v361 = vld [vmem:[%s1 + $0xa40] sm:$0xff]
    %v362 = vld [vmem:[%s1 + $0xa48] sm:$0xff]
    %v363 = vld [vmem:[%s1 + $0xa50] sm:$0xff]
    %v364 = vld [vmem:[%s1 + $0xa58] sm:$0xff]
    %v365 = vld [vmem:[%s1 + $0xa60] sm:$0xff]
    %v366 = vld [vmem:[%s1 + $0xa68] sm:$0xff]
    %v367 = vld [vmem:[%s1 + $0xa70] sm:$0xff]
    %v368 = vld [vmem:[%s1 + $0xa78] sm:$0xff]
    %v369 = vld [vmem:[%s1 + $0xa80] sm:$0xff]
    %v370 = vld [vmem:[%s1 + $0xa88] sm:$0xff]
    %v371 = vld [vmem:[%s1 + $0xa90] sm:$0xff]
    %v372 = vld [vmem:[%s1 + $0xa98] sm:$0xff]
    %v373 = vld [vmem:[%s1 + $0xaa0] sm:$0xff]
    %v374 = vld [vmem:[%s1 + $0xaa8] sm:$0xff]
    %v375 = vld [vmem:[%s1 + $0xab0] sm:$0xff]
    %v376 = vld [vmem:[%s1 + $0xab8] sm:$0xff]
    %v377 = vld [vmem:[%s1 + $0xac0] sm:$0xff]
    %v378 = vld [vmem:[%s1 + $0xac8] sm:$0xff]
    %v379 = vld [vmem:[%s1 + $0xad0] sm:$0xff]
    %v380 = vld [vmem:[%s1 + $0xad8] sm:$0xff]
    %v381 = vld [vmem:[%s1 + $0xae0] sm:$0xff]
    %v382 = vld [vmem:[%s1 + $0xae8] sm:$0xff]
    %v383 = vld [vmem:[%s1 + $0xaf0] sm:$0xff]
    %v384 = vld [vmem:[%s1 + $0xaf8] sm:$0xff]
    %v385 = vld [vmem:[%s1 + $0xb00] sm:$0xff]
    %v386 = vld [vmem:[%s1 + $0xb08] sm:$0xff]
    %v387 = vld [vmem:[%s1 + $0xb10] sm:$0xff]
    %v388 = vld [vmem:[%s1 + $0xb18] sm:$0xff]
    %v389 = vld [vmem:[%s1 + $0xb20] sm:$0xff]
    %v390 = vld [vmem:[%s1 + $0xb28] sm:$0xff]
    %v391 = vld [vmem:[%s1 + $0xb30] sm:$0xff]
    %v392 = vld [vmem:[%s1 + $0xb38] sm:$0xff]
    %v393 = vld [vmem:[%s1 + $0xb40] sm:$0xff]
    %v394 = vld [vmem:[%s1 + $0xb48] sm:$0xff]
    %v395 = vld [vmem:[%s1 + $0xb50] sm:$0xff]
    %v396 = vld [vmem:[%s1 + $0xb58] sm:$0xff]
    %v397 = vld [vmem:[%s1 + $0xb60] sm:$0xff]
    %v398 = vld [vmem:[%s1 + $0xb68] sm:$0xff]
    %v399 = vld [vmem:[%s1 + $0xb70] sm:$0xff]
    %v400 = vld [vmem:[%s1 + $0xb78] sm:$0xff]
    %v401 = vld [vmem:[%s1 + $0xb80] sm:$0xff]
    %v402 = vld [vmem:[%s1 + $0xb88] sm:$0xff]
    %v403 = vld [vmem:[%s1 + $0xb90] sm:$0xff]
    %v404 = vld [vmem:[%s1 + $0xb98] sm:$0xff]
    %v405 = vld [vmem:[%s1 + $0xba0] sm:$0xff]
    %v406 = vld [vmem:[%s1 + $0xba8] sm:$0xff]
    %v407 = vld [vmem:[%s1 + $0xbb0] sm:$0xff]
    %v408 = vld [vmem:[%s1 + $0xbb8] sm:$0xff]
    %v409 = vld [vmem:[%s1 + $0xbc0] sm:$0xff]
    %v410 = vld [vmem:[%s1 + $0xbc8] sm:$0xff]
    %v411 = vld [vmem:[%s1 + $0xbd0] sm:$0xff]
    %v412 = vld [vmem:[%s1 + $0xbd8] sm:$0xff]
    %v413 = vld [vmem:[%s1 + $0xbe0] sm:$0xff]
    %v414 = vld [vmem:[%s1 + $0xbe8] sm:$0xff]
    %v415 = vld [vmem:[%s1 + $0xbf0] sm:$0xff]
    %v416 = vld [vmem:[%s1 + $0xbf8] sm:$0xff]
    %v417 = vld [vmem:[%s2] sm:$0x1]
    %v419 = vperm.slane %v417, 0
    %427 = vst [vmem:[#allocation1] ss:$4 sm:$0xff] %v27
    %s428 = scalar_lea.vmem [#allocation1], 32
    %429 = vst [vmem:[%s428] ss:$4 sm:$0xff] %v28
    %v430 = vld.sshfl [vmem:[#allocation1] sm:$0xff pattern:$0x73625140]
    %v431 = vld.sshfl [vmem:[#allocation1 + $0x8] sm:$0xff pattern:$0x73625140]
    %v432 = vld.sshfl [vmem:[#allocation1 + $0x10] sm:$0xff pattern:$0x73625140]
    %v433 = vld.sshfl [vmem:[#allocation1 + $0x18] sm:$0xff pattern:$0x73625140]
    %v434 = vld.sshfl [vmem:[#allocation1 + $0x20] sm:$0xff pattern:$0x73625140]
    %v435 = vld.sshfl [vmem:[#allocation1 + $0x28] sm:$0xff pattern:$0x73625140]
    %v436 = vld.sshfl [vmem:[#allocation1 + $0x30] sm:$0xff pattern:$0x73625140]
    %v437 = vld.sshfl [vmem:[#allocation1 + $0x38] sm:$0xff pattern:$0x73625140]
    %438 = vst [vmem:[#allocation1] ss:$4 sm:$0xff] %v29
    %439 = vst [vmem:[%s428] ss:$4 sm:$0xff] %v30
    %v440 = vld.sshfl [vmem:[#allocation1] sm:$0xff pattern:$0x73625140]
    %v441 = vld.sshfl [vmem:[#allocation1 + $0x8] sm:$0xff pattern:$0x73625140]
    %v442 = vld.sshfl [vmem:[#allocation1 + $0x10] sm:$0xff pattern:$0x73625140]
    %v443 = vld.sshfl [vmem:[#allocation1 + $0x18] sm:$0xff pattern:$0x73625140]
    %v444 = vld.sshfl [vmem:[#allocation1 + $0x20] sm:$0xff pattern:$0x73625140]
    %v445 = vld.sshfl [vmem:[#allocation1 + $0x28] sm:$0xff pattern:$0x73625140]
    %v446 = vld.sshfl [vmem:[#allocation1 + $0x30] sm:$0xff pattern:$0x73625140]
    %v447 = vld.sshfl [vmem:[#allocation1 + $0x38] sm:$0xff pattern:$0x73625140]
    %448 = vst [vmem:[#allocation1] ss:$4 sm:$0xff] %v31
    %449 = vst [vmem:[%s428] ss:$4 sm:$0xff] %v32
    %v450 = vld.sshfl [vmem:[#allocation1] sm:$0xff pattern:$0x73625140]
    %v451 = vld.sshfl [vmem:[#allocation1 + $0x8] sm:$0xff pattern:$0x73625140]
    %v452 = vld.sshfl [vmem:[#allocation1 + $0x10] sm:$0xff pattern:$0x73625140]
    %v453 = vld.sshfl [vmem:[#allocation1 + $0x18] sm:$0xff pattern:$0x73625140]
    %v454 = vld.sshfl [vmem:[#allocation1 + $0x20] sm:$0xff pattern:$0x73625140]
    %v455 = vld.sshfl [vmem:[#allocation1 + $0x28] sm:$0xff pattern:$0x73625140]
    %v456 = vld.sshfl [vmem:[#allocation1 + $0x30] sm:$0xff pattern:$0x73625140]
    %v457 = vld.sshfl [vmem:[#allocation1 + $0x38] sm:$0xff pattern:$0x73625140]
    %482 = vmatpush.msra.mxu0 %v48
    %483 = vmatpush.msra.mxu0 %v47
    %484 = vmatpush.msra.mxu0 %v46
    %485 = vmatpush.msra.mxu0 %v45
    %486 = vmatpush.msra.mxu0 %v44
    %487 = vmatpush.msra.mxu0 %v43
    %488 = vmatpush.msra.mxu0 %v42
    %489 = vmatpush.msra.mxu0 %v41
    %490 = vmatpush.msra.mxu0 %v40
    %491 = vmatpush.msra.mxu0 %v39
    %492 = vmatpush.msra.mxu0 %v38
    %493 = vmatpush.msra.mxu0 %v37
    %494 = vmatpush.msra.mxu0 %v36
    %495 = vmatpush.msra.mxu0 %v35
    %496 = vmatpush.msra.mxu0 %v34
    %497 = vmatpush.msra.mxu0 %v33
    %498 = vmatmul.f32.gmra.mxu0 %v430
    %v499 = vpop.f32.mrf.mxu0
    %v500 = vadd.f32 %v419, %v499
    %501 = vdwg.mxu0
    %502 = vmatpush.msra.mxu0 %v64
    %503 = vmatpush.msra.mxu0 %v63
    %504 = vmatpush.msra.mxu0 %v62
    %505 = vmatpush.msra.mxu0 %v61
    %506 = vmatpush.msra.mxu0 %v60
    %507 = vmatpush.msra.mxu0 %v59
    %508 = vmatpush.msra.mxu0 %v58
    %509 = vmatpush.msra.mxu0 %v57
    %510 = vmatpush.msra.mxu0 %v56
    %511 = vmatpush.msra.mxu0 %v55
    %512 = vmatpush.msra.mxu0 %v54
    %513 = vmatpush.msra.mxu0 %v53
    %514 = vmatpush.msra.mxu0 %v52
    %515 = vmatpush.msra.mxu0 %v51
    %516 = vmatpush.msra.mxu0 %v50
    %517 = vmatpush.msra.mxu0 %v49
    %518 = vmatmul.f32.gmra.mxu0 %v431
    %v519 = vpop.f32.mrf.mxu0
    %v520 = vadd.f32 %v500, %v519
    %521 = vdwg.mxu0
    %522 = vmatpush.msra.mxu0 %v80
    %523 = vmatpush.msra.mxu0 %v79
    %524 = vmatpush.msra.mxu0 %v78
    %525 = vmatpush.msra.mxu0 %v77
    %526 = vmatpush.msra.mxu0 %v76
    %527 = vmatpush.msra.mxu0 %v75
    %528 = vmatpush.msra.mxu0 %v74
    %529 = vmatpush.msra.mxu0 %v73
    %530 = vmatpush.msra.mxu0 %v72
    %531 = vmatpush.msra.mxu0 %v71
    %532 = vmatpush.msra.mxu0 %v70
    %533 = vmatpush.msra.mxu0 %v69
    %534 = vmatpush.msra.mxu0 %v68
    %535 = vmatpush.msra.mxu0 %v67
    %536 = vmatpush.msra.mxu0 %v66
    %537 = vmatpush.msra.mxu0 %v65
    %538 = vmatmul.f32.gmra.mxu0 %v432
    %v539 = vpop.f32.mrf.mxu0
    %v540 = vadd.f32 %v520, %v539
    %541 = vdwg.mxu0
    %542 = vmatpush.msra.mxu0 %v96
    %543 = vmatpush.msra.mxu0 %v95
    %544 = vmatpush.msra.mxu0 %v94
    %545 = vmatpush.msra.mxu0 %v93
    %546 = vmatpush.msra.mxu0 %v92
    %547 = vmatpush.msra.mxu0 %v91
    %548 = vmatpush.msra.mxu0 %v90
    %549 = vmatpush.msra.mxu0 %v89
    %550 = vmatpush.msra.mxu0 %v88
    %551 = vmatpush.msra.mxu0 %v87
    %552 = vmatpush.msra.mxu0 %v86
    %553 = vmatpush.msra.mxu0 %v85
    %554 = vmatpush.msra.mxu0 %v84
    %555 = vmatpush.msra.mxu0 %v83
    %556 = vmatpush.msra.mxu0 %v82
    %557 = vmatpush.msra.mxu0 %v81
    %558 = vmatmul.f32.gmra.mxu0 %v433
    %v559 = vpop.f32.mrf.mxu0
    %v560 = vadd.f32 %v540, %v559
    %561 = vdwg.mxu0
    %562 = vmatpush.msra.mxu0 %v112
    %563 = vmatpush.msra.mxu0 %v111
    %564 = vmatpush.msra.mxu0 %v110
    %565 = vmatpush.msra.mxu0 %v109
    %566 = vmatpush.msra.mxu0 %v108
    %567 = vmatpush.msra.mxu0 %v107
    %568 = vmatpush.msra.mxu0 %v106
    %569 = vmatpush.msra.mxu0 %v105
    %570 = vmatpush.msra.mxu0 %v104
    %571 = vmatpush.msra.mxu0 %v103
    %572 = vmatpush.msra.mxu0 %v102
    %573 = vmatpush.msra.mxu0 %v101
    %574 = vmatpush.msra.mxu0 %v100
    %575 = vmatpush.msra.mxu0 %v99
    %576 = vmatpush.msra.mxu0 %v98
    %577 = vmatpush.msra.mxu0 %v97
    %578 = vmatmul.f32.gmra.mxu0 %v434
    %v579 = vpop.f32.mrf.mxu0
    %v580 = vadd.f32 %v560, %v579
    %581 = vdwg.mxu0
    %582 = vmatpush.msra.mxu0 %v128
    %583 = vmatpush.msra.mxu0 %v127
    %584 = vmatpush.msra.mxu0 %v126
    %585 = vmatpush.msra.mxu0 %v125
    %586 = vmatpush.msra.mxu0 %v124
    %587 = vmatpush.msra.mxu0 %v123
    %588 = vmatpush.msra.mxu0 %v122
    %589 = vmatpush.msra.mxu0 %v121
    %590 = vmatpush.msra.mxu0 %v120
    %591 = vmatpush.msra.mxu0 %v119
    %592 = vmatpush.msra.mxu0 %v118
    %593 = vmatpush.msra.mxu0 %v117
    %594 = vmatpush.msra.mxu0 %v116
    %595 = vmatpush.msra.mxu0 %v115
    %596 = vmatpush.msra.mxu0 %v114
    %597 = vmatpush.msra.mxu0 %v113
    %598 = vmatmul.f32.gmra.mxu0 %v435
    %v599 = vpop.f32.mrf.mxu0
    %v600 = vadd.f32 %v580, %v599
    %601 = vdwg.mxu0
    %602 = vmatpush.msra.mxu0 %v144
    %603 = vmatpush.msra.mxu0 %v143
    %604 = vmatpush.msra.mxu0 %v142
    %605 = vmatpush.msra.mxu0 %v141
    %606 = vmatpush.msra.mxu0 %v140
    %607 = vmatpush.msra.mxu0 %v139
    %608 = vmatpush.msra.mxu0 %v138
    %609 = vmatpush.msra.mxu0 %v137
    %610 = vmatpush.msra.mxu0 %v136
    %611 = vmatpush.msra.mxu0 %v135
    %612 = vmatpush.msra.mxu0 %v134
    %613 = vmatpush.msra.mxu0 %v133
    %614 = vmatpush.msra.mxu0 %v132
    %615 = vmatpush.msra.mxu0 %v131
    %616 = vmatpush.msra.mxu0 %v130
    %617 = vmatpush.msra.mxu0 %v129
    %618 = vmatmul.f32.gmra.mxu0 %v436
    %v619 = vpop.f32.mrf.mxu0
    %v620 = vadd.f32 %v600, %v619
    %621 = vdwg.mxu0
    %622 = vmatpush.msra.mxu0 %v160
    %623 = vmatpush.msra.mxu0 %v159
    %624 = vmatpush.msra.mxu0 %v158
    %625 = vmatpush.msra.mxu0 %v157
    %626 = vmatpush.msra.mxu0 %v156
    %627 = vmatpush.msra.mxu0 %v155
    %628 = vmatpush.msra.mxu0 %v154
    %629 = vmatpush.msra.mxu0 %v153
    %630 = vmatpush.msra.mxu0 %v152
    %631 = vmatpush.msra.mxu0 %v151
    %632 = vmatpush.msra.mxu0 %v150
    %633 = vmatpush.msra.mxu0 %v149
    %634 = vmatpush.msra.mxu0 %v148
    %635 = vmatpush.msra.mxu0 %v147
    %636 = vmatpush.msra.mxu0 %v146
    %637 = vmatpush.msra.mxu0 %v145
    %638 = vmatmul.f32.gmra.mxu0 %v437
    %v639 = vpop.f32.mrf.mxu0
    %v640 = vadd.f32 %v620, %v639
    %641 = vdwg.mxu0
    %642 = vmatpush.msra.mxu0 %v176
    %643 = vmatpush.msra.mxu0 %v175
    %644 = vmatpush.msra.mxu0 %v174
    %645 = vmatpush.msra.mxu0 %v173
    %646 = vmatpush.msra.mxu0 %v172
    %647 = vmatpush.msra.mxu0 %v171
    %648 = vmatpush.msra.mxu0 %v170
    %649 = vmatpush.msra.mxu0 %v169
    %650 = vmatpush.msra.mxu0 %v168
    %651 = vmatpush.msra.mxu0 %v167
    %652 = vmatpush.msra.mxu0 %v166
    %653 = vmatpush.msra.mxu0 %v165
    %654 = vmatpush.msra.mxu0 %v164
    %655 = vmatpush.msra.mxu0 %v163
    %656 = vmatpush.msra.mxu0 %v162
    %657 = vmatpush.msra.mxu0 %v161
    %658 = vmatmul.f32.gmra.mxu0 %v440
    %v659 = vpop.f32.mrf.mxu0
    %v660 = vadd.f32 %v640, %v659
    %661 = vdwg.mxu0
    %662 = vmatpush.msra.mxu0 %v192
    %663 = vmatpush.msra.mxu0 %v191
    %664 = vmatpush.msra.mxu0 %v190
    %665 = vmatpush.msra.mxu0 %v189
    %666 = vmatpush.msra.mxu0 %v188
    %667 = vmatpush.msra.mxu0 %v187
    %668 = vmatpush.msra.mxu0 %v186
    %669 = vmatpush.msra.mxu0 %v185
    %670 = vmatpush.msra.mxu0 %v184
    %671 = vmatpush.msra.mxu0 %v183
    %672 = vmatpush.msra.mxu0 %v182
    %673 = vmatpush.msra.mxu0 %v181
    %674 = vmatpush.msra.mxu0 %v180
    %675 = vmatpush.msra.mxu0 %v179
    %676 = vmatpush.msra.mxu0 %v178
    %677 = vmatpush.msra.mxu0 %v177
    %678 = vmatmul.f32.gmra.mxu0 %v441
    %v679 = vpop.f32.mrf.mxu0
    %v680 = vadd.f32 %v660, %v679
    %681 = vdwg.mxu0
    %682 = vmatpush.msra.mxu0 %v208
    %683 = vmatpush.msra.mxu0 %v207
    %684 = vmatpush.msra.mxu0 %v206
    %685 = vmatpush.msra.mxu0 %v205
    %686 = vmatpush.msra.mxu0 %v204
    %687 = vmatpush.msra.mxu0 %v203
    %688 = vmatpush.msra.mxu0 %v202
    %689 = vmatpush.msra.mxu0 %v201
    %690 = vmatpush.msra.mxu0 %v200
    %691 = vmatpush.msra.mxu0 %v199
    %692 = vmatpush.msra.mxu0 %v198
    %693 = vmatpush.msra.mxu0 %v197
    %694 = vmatpush.msra.mxu0 %v196
    %695 = vmatpush.msra.mxu0 %v195
    %696 = vmatpush.msra.mxu0 %v194
    %697 = vmatpush.msra.mxu0 %v193
    %698 = vmatmul.f32.gmra.mxu0 %v442
    %v699 = vpop.f32.mrf.mxu0
    %v700 = vadd.f32 %v680, %v699
    %701 = vdwg.mxu0
    %702 = vmatpush.msra.mxu0 %v224
    %703 = vmatpush.msra.mxu0 %v223
    %704 = vmatpush.msra.mxu0 %v222
    %705 = vmatpush.msra.mxu0 %v221
    %706 = vmatpush.msra.mxu0 %v220
    %707 = vmatpush.msra.mxu0 %v219
    %708 = vmatpush.msra.mxu0 %v218
    %709 = vmatpush.msra.mxu0 %v217
    %710 = vmatpush.msra.mxu0 %v216
    %711 = vmatpush.msra.mxu0 %v215
    %712 = vmatpush.msra.mxu0 %v214
    %713 = vmatpush.msra.mxu0 %v213
    %714 = vmatpush.msra.mxu0 %v212
    %715 = vmatpush.msra.mxu0 %v211
    %716 = vmatpush.msra.mxu0 %v210
    %717 = vmatpush.msra.mxu0 %v209
    %718 = vmatmul.f32.gmra.mxu0 %v443
    %v719 = vpop.f32.mrf.mxu0
    %v720 = vadd.f32 %v700, %v719
    %721 = vdwg.mxu0
    %722 = vmatpush.msra.mxu0 %v240
    %723 = vmatpush.msra.mxu0 %v239
    %724 = vmatpush.msra.mxu0 %v238
    %725 = vmatpush.msra.mxu0 %v237
    %726 = vmatpush.msra.mxu0 %v236
    %727 = vmatpush.msra.mxu0 %v235
    %728 = vmatpush.msra.mxu0 %v234
    %729 = vmatpush.msra.mxu0 %v233
    %730 = vmatpush.msra.mxu0 %v232
    %731 = vmatpush.msra.mxu0 %v231
    %732 = vmatpush.msra.mxu0 %v230
    %733 = vmatpush.msra.mxu0 %v229
    %734 = vmatpush.msra.mxu0 %v228
    %735 = vmatpush.msra.mxu0 %v227
    %736 = vmatpush.msra.mxu0 %v226
    %737 = vmatpush.msra.mxu0 %v225
    %738 = vmatmul.f32.gmra.mxu0 %v444
    %v739 = vpop.f32.mrf.mxu0
    %v740 = vadd.f32 %v720, %v739
    %741 = vdwg.mxu0
    %742 = vmatpush.msra.mxu0 %v256
    %743 = vmatpush.msra.mxu0 %v255
    %744 = vmatpush.msra.mxu0 %v254
    %745 = vmatpush.msra.mxu0 %v253
    %746 = vmatpush.msra.mxu0 %v252
    %747 = vmatpush.msra.mxu0 %v251
    %748 = vmatpush.msra.mxu0 %v250
    %749 = vmatpush.msra.mxu0 %v249
    %750 = vmatpush.msra.mxu0 %v248
    %751 = vmatpush.msra.mxu0 %v247
    %752 = vmatpush.msra.mxu0 %v246
    %753 = vmatpush.msra.mxu0 %v245
    %754 = vmatpush.msra.mxu0 %v244
    %755 = vmatpush.msra.mxu0 %v243
    %756 = vmatpush.msra.mxu0 %v242
    %757 = vmatpush.msra.mxu0 %v241
    %758 = vmatmul.f32.gmra.mxu0 %v445
    %v759 = vpop.f32.mrf.mxu0
    %v760 = vadd.f32 %v740, %v759
    %761 = vdwg.mxu0
    %762 = vmatpush.msra.mxu0 %v272
    %763 = vmatpush.msra.mxu0 %v271
    %764 = vmatpush.msra.mxu0 %v270
    %765 = vmatpush.msra.mxu0 %v269
    %766 = vmatpush.msra.mxu0 %v268
    %767 = vmatpush.msra.mxu0 %v267
    %768 = vmatpush.msra.mxu0 %v266
    %769 = vmatpush.msra.mxu0 %v265
    %770 = vmatpush.msra.mxu0 %v264
    %771 = vmatpush.msra.mxu0 %v263
    %772 = vmatpush.msra.mxu0 %v262
    %773 = vmatpush.msra.mxu0 %v261
    %774 = vmatpush.msra.mxu0 %v260
    %775 = vmatpush.msra.mxu0 %v259
    %776 = vmatpush.msra.mxu0 %v258
    %777 = vmatpush.msra.mxu0 %v257
    %778 = vmatmul.f32.gmra.mxu0 %v446
    %v779 = vpop.f32.mrf.mxu0
    %v780 = vadd.f32 %v760, %v779
    %781 = vdwg.mxu0
    %782 = vmatpush.msra.mxu0 %v288
    %783 = vmatpush.msra.mxu0 %v287
    %784 = vmatpush.msra.mxu0 %v286
    %785 = vmatpush.msra.mxu0 %v285
    %786 = vmatpush.msra.mxu0 %v284
    %787 = vmatpush.msra.mxu0 %v283
    %788 = vmatpush.msra.mxu0 %v282
    %789 = vmatpush.msra.mxu0 %v281
    %790 = vmatpush.msra.mxu0 %v280
    %791 = vmatpush.msra.mxu0 %v279
    %792 = vmatpush.msra.mxu0 %v278
    %793 = vmatpush.msra.mxu0 %v277
    %794 = vmatpush.msra.mxu0 %v276
    %795 = vmatpush.msra.mxu0 %v275
    %796 = vmatpush.msra.mxu0 %v274
    %797 = vmatpush.msra.mxu0 %v273
    %798 = vmatmul.f32.gmra.mxu0 %v447
    %v799 = vpop.f32.mrf.mxu0
    %v800 = vadd.f32 %v780, %v799
    %801 = vdwg.mxu0
    %802 = vmatpush.msra.mxu0 %v304
    %803 = vmatpush.msra.mxu0 %v303
    %804 = vmatpush.msra.mxu0 %v302
    %805 = vmatpush.msra.mxu0 %v301
    %806 = vmatpush.msra.mxu0 %v300
    %807 = vmatpush.msra.mxu0 %v299
    %808 = vmatpush.msra.mxu0 %v298
    %809 = vmatpush.msra.mxu0 %v297
    %810 = vmatpush.msra.mxu0 %v296
    %811 = vmatpush.msra.mxu0 %v295
    %812 = vmatpush.msra.mxu0 %v294
    %813 = vmatpush.msra.mxu0 %v293
    %814 = vmatpush.msra.mxu0 %v292
    %815 = vmatpush.msra.mxu0 %v291
    %816 = vmatpush.msra.mxu0 %v290
    %817 = vmatpush.msra.mxu0 %v289
    %818 = vmatmul.f32.gmra.mxu0 %v450
    %v819 = vpop.f32.mrf.mxu0
    %v820 = vadd.f32 %v800, %v819
    %821 = vdwg.mxu0
    %822 = vmatpush.msra.mxu0 %v320
    %823 = vmatpush.msra.mxu0 %v319
    %824 = vmatpush.msra.mxu0 %v318
    %825 = vmatpush.msra.mxu0 %v317
    %826 = vmatpush.msra.mxu0 %v316
    %827 = vmatpush.msra.mxu0 %v315
    %828 = vmatpush.msra.mxu0 %v314
    %829 = vmatpush.msra.mxu0 %v313
    %830 = vmatpush.msra.mxu0 %v312
    %831 = vmatpush.msra.mxu0 %v311
    %832 = vmatpush.msra.mxu0 %v310
    %833 = vmatpush.msra.mxu0 %v309
    %834 = vmatpush.msra.mxu0 %v308
    %835 = vmatpush.msra.mxu0 %v307
    %836 = vmatpush.msra.mxu0 %v306
    %837 = vmatpush.msra.mxu0 %v305
    %838 = vmatmul.f32.gmra.mxu0 %v451
    %v839 = vpop.f32.mrf.mxu0
    %v840 = vadd.f32 %v820, %v839
    %841 = vdwg.mxu0
    %842 = vmatpush.msra.mxu0 %v336
    %843 = vmatpush.msra.mxu0 %v335
    %844 = vmatpush.msra.mxu0 %v334
    %845 = vmatpush.msra.mxu0 %v333
    %846 = vmatpush.msra.mxu0 %v332
    %847 = vmatpush.msra.mxu0 %v331
    %848 = vmatpush.msra.mxu0 %v330
    %849 = vmatpush.msra.mxu0 %v329
    %850 = vmatpush.msra.mxu0 %v328
    %851 = vmatpush.msra.mxu0 %v327
    %852 = vmatpush.msra.mxu0 %v326
    %853 = vmatpush.msra.mxu0 %v325
    %854 = vmatpush.msra.mxu0 %v324
    %855 = vmatpush.msra.mxu0 %v323
    %856 = vmatpush.msra.mxu0 %v322
    %857 = vmatpush.msra.mxu0 %v321
    %858 = vmatmul.f32.gmra.mxu0 %v452
    %v859 = vpop.f32.mrf.mxu0
    %v860 = vadd.f32 %v840, %v859
    %861 = vdwg.mxu0
    %862 = vmatpush.msra.mxu0 %v352
    %863 = vmatpush.msra.mxu0 %v351
    %864 = vmatpush.msra.mxu0 %v350
    %865 = vmatpush.msra.mxu0 %v349
    %866 = vmatpush.msra.mxu0 %v348
    %867 = vmatpush.msra.mxu0 %v347
    %868 = vmatpush.msra.mxu0 %v346
    %869 = vmatpush.msra.mxu0 %v345
    %870 = vmatpush.msra.mxu0 %v344
    %871 = vmatpush.msra.mxu0 %v343
    %872 = vmatpush.msra.mxu0 %v342
    %873 = vmatpush.msra.mxu0 %v341
    %874 = vmatpush.msra.mxu0 %v340
    %875 = vmatpush.msra.mxu0 %v339
    %876 = vmatpush.msra.mxu0 %v338
    %877 = vmatpush.msra.mxu0 %v337
    %878 = vmatmul.f32.gmra.mxu0 %v453
    %v879 = vpop.f32.mrf.mxu0
    %v880 = vadd.f32 %v860, %v879
    %881 = vdwg.mxu0
    %882 = vmatpush.msra.mxu0 %v368
    %883 = vmatpush.msra.mxu0 %v367
    %884 = vmatpush.msra.mxu0 %v366
    %885 = vmatpush.msra.mxu0 %v365
    %886 = vmatpush.msra.mxu0 %v364
    %887 = vmatpush.msra.mxu0 %v363
    %888 = vmatpush.msra.mxu0 %v362
    %889 = vmatpush.msra.mxu0 %v361
    %890 = vmatpush.msra.mxu0 %v360
    %891 = vmatpush.msra.mxu0 %v359
    %892 = vmatpush.msra.mxu0 %v358
    %893 = vmatpush.msra.mxu0 %v357
    %894 = vmatpush.msra.mxu0 %v356
    %895 = vmatpush.msra.mxu0 %v355
    %896 = vmatpush.msra.mxu0 %v354
    %897 = vmatpush.msra.mxu0 %v353
    %898 = vmatmul.f32.gmra.mxu0 %v454
    %v899 = vpop.f32.mrf.mxu0
    %v900 = vadd.f32 %v880, %v899
    %901 = vdwg.mxu0
    %902 = vmatpush.msra.mxu0 %v384
    %903 = vmatpush.msra.mxu0 %v383
    %904 = vmatpush.msra.mxu0 %v382
    %905 = vmatpush.msra.mxu0 %v381
    %906 = vmatpush.msra.mxu0 %v380
    %907 = vmatpush.msra.mxu0 %v379
    %908 = vmatpush.msra.mxu0 %v378
    %909 = vmatpush.msra.mxu0 %v377
    %910 = vmatpush.msra.mxu0 %v376
    %911 = vmatpush.msra.mxu0 %v375
    %912 = vmatpush.msra.mxu0 %v374
    %913 = vmatpush.msra.mxu0 %v373
    %914 = vmatpush.msra.mxu0 %v372
    %915 = vmatpush.msra.mxu0 %v371
    %916 = vmatpush.msra.mxu0 %v370
    %917 = vmatpush.msra.mxu0 %v369
    %918 = vmatmul.f32.gmra.mxu0 %v455
    %v919 = vpop.f32.mrf.mxu0
    %v920 = vadd.f32 %v900, %v919
    %921 = vdwg.mxu0
    %922 = vmatpush.msra.mxu0 %v400
    %923 = vmatpush.msra.mxu0 %v399
    %924 = vmatpush.msra.mxu0 %v398
    %925 = vmatpush.msra.mxu0 %v397
    %926 = vmatpush.msra.mxu0 %v396
    %927 = vmatpush.msra.mxu0 %v395
    %928 = vmatpush.msra.mxu0 %v394
    %929 = vmatpush.msra.mxu0 %v393
    %930 = vmatpush.msra.mxu0 %v392
    %931 = vmatpush.msra.mxu0 %v391
    %932 = vmatpush.msra.mxu0 %v390
    %933 = vmatpush.msra.mxu0 %v389
    %934 = vmatpush.msra.mxu0 %v388
    %935 = vmatpush.msra.mxu0 %v387
    %936 = vmatpush.msra.mxu0 %v386
    %937 = vmatpush.msra.mxu0 %v385
    %938 = vmatmul.f32.gmra.mxu0 %v456
    %v939 = vpop.f32.mrf.mxu0
    %v940 = vadd.f32 %v920, %v939
    %941 = vdwg.mxu0
    %942 = vmatpush.msra.mxu0 %v416
    %943 = vmatpush.msra.mxu0 %v415
    %944 = vmatpush.msra.mxu0 %v414
    %945 = vmatpush.msra.mxu0 %v413
    %946 = vmatpush.msra.mxu0 %v412
    %947 = vmatpush.msra.mxu0 %v411
    %948 = vmatpush.msra.mxu0 %v410
    %949 = vmatpush.msra.mxu0 %v409
    %950 = vmatpush.msra.mxu0 %v408
    %951 = vmatpush.msra.mxu0 %v407
    %952 = vmatpush.msra.mxu0 %v406
    %953 = vmatpush.msra.mxu0 %v405
    %954 = vmatpush.msra.mxu0 %v404
    %955 = vmatpush.msra.mxu0 %v403
    %956 = vmatpush.msra.mxu0 %v402
    %957 = vmatpush.msra.mxu0 %v401
    %958 = vmatmul.f32.gmra.mxu0 %v457
    %v959 = vpop.f32.mrf.mxu0
    %v960 = vadd.f32 %v940, %v959
    %961 = vdwg.mxu0
    %v962 = vmax.f32 %v960, 0.0
    %v963 = vld [vmem:[%s3] sm:$0xff]
    %v964 = vld [vmem:[%s3 + $0x8] sm:$0xff]
    %v965 = vld [vmem:[%s3 + $0x10] sm:$0xff]
    %v966 = vld [vmem:[%s3 + $0x18] sm:$0xff]
    %v967 = vld [vmem:[%s3 + $0x20] sm:$0xff]
    %v968 = vld [vmem:[%s3 + $0x28] sm:$0xff]
    %v969 = vld [vmem:[%s3 + $0x30] sm:$0xff]
    %v970 = vld [vmem:[%s3 + $0x38] sm:$0xff]
    %v971 = vld [vmem:[%s4] sm:$0x1]
    %v973 = vperm.slane %v971, 0
    %vm975 = vcmask 523264
    %v977 = vsel %vm975, %v962, 0
    %979 = vmatpush.msra.mxu0 0.0
    %980 = vmatpush.msra.mxu0 0.0
    %981 = vmatpush.msra.mxu0 0.0
    %982 = vmatpush.msra.mxu0 0.0
    %983 = vmatpush.msra.mxu0 0.0
    %984 = vmatpush.msra.mxu0 0.0
    %985 = vmatpush.msra.mxu0 0.0
    %986 = vmatpush.msra.mxu0 0.0
    %987 = vmatpush.msra.mxu0 %v970
    %988 = vmatpush.msra.mxu0 %v969
    %989 = vmatpush.msra.mxu0 %v968
    %990 = vmatpush.msra.mxu0 %v967
    %991 = vmatpush.msra.mxu0 %v966
    %992 = vmatpush.msra.mxu0 %v965
    %993 = vmatpush.msra.mxu0 %v964
    %994 = vmatpush.msra.mxu0 %v963
    %995 = vmatmul.f32.gmra.mxu0 %v977
    %v996 = vpop.f32.mrf.mxu0
    %v997 = vadd.f32 %v973, %v996
    %998 = vdwg.mxu0
    %v999 = vmax.f32 %v997, 0.0
    %v1000 = vld [vmem:[%s5] sm:$0xff]
    %v1001 = vld [vmem:[%s5 + $0x8] sm:$0xff]
    %v1002 = vld [vmem:[%s5 + $0x10] sm:$0xff]
    %v1003 = vld [vmem:[%s5 + $0x18] sm:$0xff]
    %v1004 = vld [vmem:[%s5 + $0x20] sm:$0xff]
    %v1005 = vld [vmem:[%s5 + $0x28] sm:$0xff]
    %v1006 = vld [vmem:[%s5 + $0x30] sm:$0xff]
    %v1007 = vld [vmem:[%s5 + $0x38] sm:$0xff]
    %v1008 = vld [vmem:[%s5 + $0x40] sm:$0xff]
    %v1009 = vld [vmem:[%s5 + $0x48] sm:$0xff]
    %v1010 = vld [vmem:[%s5 + $0x50] sm:$0xff]
    %v1011 = vld [vmem:[%s5 + $0x58] sm:$0xff]
    %v1012 = vld [vmem:[%s5 + $0x60] sm:$0xff]
    %v1013 = vld [vmem:[%s5 + $0x68] sm:$0xff]
    %v1014 = vld [vmem:[%s5 + $0x70] sm:$0xff]
    %v1015 = vld [vmem:[%s5 + $0x78] sm:$0xff]
    %v1016 = vld [vmem:[%s5 + $0x80] sm:$0xff]
    %v1017 = vld [vmem:[%s5 + $0x88] sm:$0xff]
    %v1018 = vld [vmem:[%s5 + $0x90] sm:$0xff]
    %v1019 = vld [vmem:[%s5 + $0x98] sm:$0xff]
    %v1020 = vld [vmem:[%s5 + $0xa0] sm:$0xff]
    %v1021 = vld [vmem:[%s5 + $0xa8] sm:$0xff]
    %v1022 = vld [vmem:[%s5 + $0xb0] sm:$0xff]
    %v1023 = vld [vmem:[%s5 + $0xb8] sm:$0xff]
    %v1024 = vld [vmem:[%s5 + $0xc0] sm:$0xff]
    %v1025 = vld [vmem:[%s5 + $0xc8] sm:$0xff]
    %v1026 = vld [vmem:[%s5 + $0xd0] sm:$0xff]
    %v1027 = vld [vmem:[%s5 + $0xd8] sm:$0xff]
    %v1028 = vld [vmem:[%s5 + $0xe0] sm:$0xff]
    %v1029 = vld [vmem:[%s5 + $0xe8] sm:$0xff]
    %v1030 = vld [vmem:[%s5 + $0xf0] sm:$0xff]
    %v1031 = vld [vmem:[%s5 + $0xf8] sm:$0xff]
    %v1032 = vld [vmem:[%s5 + $0x100] sm:$0xff]
    %v1033 = vld [vmem:[%s5 + $0x108] sm:$0xff]
    %v1034 = vld [vmem:[%s5 + $0x110] sm:$0xff]
    %v1035 = vld [vmem:[%s5 + $0x118] sm:$0xff]
    %v1036 = vld [vmem:[%s5 + $0x120] sm:$0xff]
    %v1037 = vld [vmem:[%s5 + $0x128] sm:$0xff]
    %v1038 = vld [vmem:[%s5 + $0x130] sm:$0xff]
    %v1039 = vld [vmem:[%s5 + $0x138] sm:$0xff]
    %v1040 = vld [vmem:[%s5 + $0x140] sm:$0xff]
    %v1041 = vld [vmem:[%s5 + $0x148] sm:$0xff]
    %v1042 = vld [vmem:[%s5 + $0x150] sm:$0xff]
    %v1043 = vld [vmem:[%s5 + $0x158] sm:$0xff]
    %v1044 = vld [vmem:[%s5 + $0x160] sm:$0xff]
    %v1045 = vld [vmem:[%s5 + $0x168] sm:$0xff]
    %v1046 = vld [vmem:[%s5 + $0x170] sm:$0xff]
    %v1047 = vld [vmem:[%s5 + $0x178] sm:$0xff]
    %v1048 = vld [vmem:[%s5 + $0x180] sm:$0xff]
    %v1049 = vld [vmem:[%s5 + $0x188] sm:$0xff]
    %v1050 = vld [vmem:[%s5 + $0x190] sm:$0xff]
    %v1051 = vld [vmem:[%s5 + $0x198] sm:$0xff]
    %v1052 = vld [vmem:[%s5 + $0x1a0] sm:$0xff]
    %v1053 = vld [vmem:[%s5 + $0x1a8] sm:$0xff]
    %v1054 = vld [vmem:[%s5 + $0x1b0] sm:$0xff]
    %v1055 = vld [vmem:[%s5 + $0x1b8] sm:$0xff]
    %v1056 = vld [vmem:[%s5 + $0x1c0] sm:$0xff]
    %v1057 = vld [vmem:[%s5 + $0x1c8] sm:$0xff]
    %v1058 = vld [vmem:[%s5 + $0x1d0] sm:$0xff]
    %v1059 = vld [vmem:[%s5 + $0x1d8] sm:$0xff]
    %v1060 = vld [vmem:[%s5 + $0x1e0] sm:$0xff]
    %v1061 = vld [vmem:[%s5 + $0x1e8] sm:$0xff]
    %v1062 = vld [vmem:[%s5 + $0x1f0] sm:$0xff]
    %v1063 = vld [vmem:[%s5 + $0x1f8] sm:$0xff]
    %v1064 = vld [vmem:[%s5 + $0x200] sm:$0xff]
    %v1065 = vld [vmem:[%s5 + $0x208] sm:$0xff]
    %v1066 = vld [vmem:[%s5 + $0x210] sm:$0xff]
    %v1067 = vld [vmem:[%s5 + $0x218] sm:$0xff]
    %v1068 = vld [vmem:[%s5 + $0x220] sm:$0xff]
    %v1069 = vld [vmem:[%s5 + $0x228] sm:$0xff]
    %v1070 = vld [vmem:[%s5 + $0x230] sm:$0xff]
    %v1071 = vld [vmem:[%s5 + $0x238] sm:$0xff]
    %v1072 = vld [vmem:[%s5 + $0x240] sm:$0xff]
    %v1073 = vld [vmem:[%s5 + $0x248] sm:$0xff]
    %v1074 = vld [vmem:[%s5 + $0x250] sm:$0xff]
    %v1075 = vld [vmem:[%s5 + $0x258] sm:$0xff]
    %v1076 = vld [vmem:[%s5 + $0x260] sm:$0xff]
    %v1077 = vld [vmem:[%s5 + $0x268] sm:$0xff]
    %v1078 = vld [vmem:[%s5 + $0x270] sm:$0xff]
    %v1079 = vld [vmem:[%s5 + $0x278] sm:$0xff]
    %v1080 = vld [vmem:[%s5 + $0x280] sm:$0xff]
    %v1081 = vld [vmem:[%s5 + $0x288] sm:$0xff]
    %v1082 = vld [vmem:[%s5 + $0x290] sm:$0xff]
    %v1083 = vld [vmem:[%s5 + $0x298] sm:$0xff]
    %v1084 = vld [vmem:[%s5 + $0x2a0] sm:$0xff]
    %v1085 = vld [vmem:[%s5 + $0x2a8] sm:$0xff]
    %v1086 = vld [vmem:[%s5 + $0x2b0] sm:$0xff]
    %v1087 = vld [vmem:[%s5 + $0x2b8] sm:$0xff]
    %v1088 = vld [vmem:[%s5 + $0x2c0] sm:$0xff]
    %v1089 = vld [vmem:[%s5 + $0x2c8] sm:$0xff]
    %v1090 = vld [vmem:[%s5 + $0x2d0] sm:$0xff]
    %v1091 = vld [vmem:[%s5 + $0x2d8] sm:$0xff]
    %v1092 = vld [vmem:[%s5 + $0x2e0] sm:$0xff]
    %v1093 = vld [vmem:[%s5 + $0x2e8] sm:$0xff]
    %v1094 = vld [vmem:[%s5 + $0x2f0] sm:$0xff]
    %v1095 = vld [vmem:[%s5 + $0x2f8] sm:$0xff]
    %v1096 = vld [vmem:[%s6] sm:$0xff]
    %v1097 = vld [vmem:[%s6 + $0x8] sm:$0xff]
    %v1098 = vld [vmem:[%s6 + $0x10] sm:$0xff]
    %v1102 = vperm.slane %v1096, 0
    %v1103 = vperm.slane %v1096, 1
    %v1104 = vperm.slane %v1096, 2
    %v1105 = vperm.slane %v1096, 3
    %v1106 = vperm.slane %v1096, 4
    %v1107 = vperm.slane %v1096, 5
    %v1108 = vperm.slane %v1096, 6
    %v1109 = vperm.slane %v1096, 7
    %v1110 = vperm.slane %v1097, 0
    %v1111 = vperm.slane %v1097, 1
    %v1112 = vperm.slane %v1097, 2
    %v1113 = vperm.slane %v1097, 3
    %v1114 = vperm.slane %v1097, 4
    %v1115 = vperm.slane %v1097, 5
    %v1116 = vperm.slane %v1097, 6
    %v1117 = vperm.slane %v1097, 7
    %v1118 = vperm.slane %v1098, 0
    %v1119 = vperm.slane %v1098, 1
    %v1120 = vperm.slane %v1098, 2
    %v1121 = vperm.slane %v1098, 3
    %v1122 = vperm.slane %v1098, 4
    %v1123 = vperm.slane %v1098, 5
    %v1124 = vperm.slane %v1098, 6
    %v1125 = vperm.slane %v1098, 7
    %vm1150 = vcmask 261120
    %v1152 = vsel %vm1150, %v999, 0
    %1154 = vmatpush.msra.mxu0 0.0
    %1155 = vmatpush.msra.mxu0 0.0
    %1156 = vmatpush.msra.mxu0 0.0
    %1157 = vmatpush.msra.mxu0 0.0
    %1158 = vmatpush.msra.mxu0 0.0
    %1159 = vmatpush.msra.mxu0 0.0
    %1160 = vmatpush.msra.mxu0 0.0
    %1161 = vmatpush.msra.mxu0 0.0
    %1162 = vmatpush.msra.mxu0 0.0
    %1163 = vmatpush.msra.mxu0 0.0
    %1164 = vmatpush.msra.mxu0 0.0
    %1165 = vmatpush.msra.mxu0 0.0
    %1166 = vmatpush.msra.mxu0 %v1072
    %1167 = vmatpush.msra.mxu0 %v1048
    %1168 = vmatpush.msra.mxu0 %v1024
    %1169 = vmatpush.msra.mxu0 %v1000
    %1170 = vmatmul.f32.gmra.mxu0 %v1152
    %v1171 = vpop.f32.mrf.mxu0
    %v1172 = vadd.f32 %v1102, %v1171
    %1173 = vdwg.mxu0
    %1174 = vmatpush.msra.mxu0 0.0
    %1175 = vmatpush.msra.mxu0 0.0
    %1176 = vmatpush.msra.mxu0 0.0
    %1177 = vmatpush.msra.mxu0 0.0
    %1178 = vmatpush.msra.mxu0 0.0
    %1179 = vmatpush.msra.mxu0 0.0
    %1180 = vmatpush.msra.mxu0 0.0
    %1181 = vmatpush.msra.mxu0 0.0
    %1182 = vmatpush.msra.mxu0 0.0
    %1183 = vmatpush.msra.mxu0 0.0
    %1184 = vmatpush.msra.mxu0 0.0
    %1185 = vmatpush.msra.mxu0 0.0
    %1186 = vmatpush.msra.mxu0 %v1073
    %1187 = vmatpush.msra.mxu0 %v1049
    %1188 = vmatpush.msra.mxu0 %v1025
    %1189 = vmatpush.msra.mxu0 %v1001
    %1190 = vmatmul.f32.gmra.mxu0 %v1152
    %v1191 = vpop.f32.mrf.mxu0
    %v1192 = vadd.f32 %v1103, %v1191
    %1193 = vdwg.mxu0
    %1194 = vmatpush.msra.mxu0 0.0
    %1195 = vmatpush.msra.mxu0 0.0
    %1196 = vmatpush.msra.mxu0 0.0
    %1197 = vmatpush.msra.mxu0 0.0
    %1198 = vmatpush.msra.mxu0 0.0
    %1199 = vmatpush.msra.mxu0 0.0
    %1200 = vmatpush.msra.mxu0 0.0
    %1201 = vmatpush.msra.mxu0 0.0
    %1202 = vmatpush.msra.mxu0 0.0
    %1203 = vmatpush.msra.mxu0 0.0
    %1204 = vmatpush.msra.mxu0 0.0
    %1205 = vmatpush.msra.mxu0 0.0
    %1206 = vmatpush.msra.mxu0 %v1074
    %1207 = vmatpush.msra.mxu0 %v1050
    %1208 = vmatpush.msra.mxu0 %v1026
    %1209 = vmatpush.msra.mxu0 %v1002
    %1210 = vmatmul.f32.gmra.mxu0 %v1152
    %v1211 = vpop.f32.mrf.mxu0
    %v1212 = vadd.f32 %v1104, %v1211
    %1213 = vdwg.mxu0
    %1214 = vmatpush.msra.mxu0 0.0
    %1215 = vmatpush.msra.mxu0 0.0
    %1216 = vmatpush.msra.mxu0 0.0
    %1217 = vmatpush.msra.mxu0 0.0
    %1218 = vmatpush.msra.mxu0 0.0
    %1219 = vmatpush.msra.mxu0 0.0
    %1220 = vmatpush.msra.mxu0 0.0
    %1221 = vmatpush.msra.mxu0 0.0
    %1222 = vmatpush.msra.mxu0 0.0
    %1223 = vmatpush.msra.mxu0 0.0
    %1224 = vmatpush.msra.mxu0 0.0
    %1225 = vmatpush.msra.mxu0 0.0
    %1226 = vmatpush.msra.mxu0 %v1075
    %1227 = vmatpush.msra.mxu0 %v1051
    %1228 = vmatpush.msra.mxu0 %v1027
    %1229 = vmatpush.msra.mxu0 %v1003
    %1230 = vmatmul.f32.gmra.mxu0 %v1152
    %v1231 = vpop.f32.mrf.mxu0
    %v1232 = vadd.f32 %v1105, %v1231
    %1233 = vdwg.mxu0
    %1234 = vmatpush.msra.mxu0 0.0
    %1235 = vmatpush.msra.mxu0 0.0
    %1236 = vmatpush.msra.mxu0 0.0
    %1237 = vmatpush.msra.mxu0 0.0
    %1238 = vmatpush.msra.mxu0 0.0
    %1239 = vmatpush.msra.mxu0 0.0
    %1240 = vmatpush.msra.mxu0 0.0
    %1241 = vmatpush.msra.mxu0 0.0
    %1242 = vmatpush.msra.mxu0 0.0
    %1243 = vmatpush.msra.mxu0 0.0
    %1244 = vmatpush.msra.mxu0 0.0
    %1245 = vmatpush.msra.mxu0 0.0
    %1246 = vmatpush.msra.mxu0 %v1076
    %1247 = vmatpush.msra.mxu0 %v1052
    %1248 = vmatpush.msra.mxu0 %v1028
    %1249 = vmatpush.msra.mxu0 %v1004
    %1250 = vmatmul.f32.gmra.mxu0 %v1152
    %v1251 = vpop.f32.mrf.mxu0
    %v1252 = vadd.f32 %v1106, %v1251
    %1253 = vdwg.mxu0
    %1254 = vmatpush.msra.mxu0 0.0
    %1255 = vmatpush.msra.mxu0 0.0
    %1256 = vmatpush.msra.mxu0 0.0
    %1257 = vmatpush.msra.mxu0 0.0
    %1258 = vmatpush.msra.mxu0 0.0
    %1259 = vmatpush.msra.mxu0 0.0
    %1260 = vmatpush.msra.mxu0 0.0
    %1261 = vmatpush.msra.mxu0 0.0
    %1262 = vmatpush.msra.mxu0 0.0
    %1263 = vmatpush.msra.mxu0 0.0
    %1264 = vmatpush.msra.mxu0 0.0
    %1265 = vmatpush.msra.mxu0 0.0
    %1266 = vmatpush.msra.mxu0 %v1077
    %1267 = vmatpush.msra.mxu0 %v1053
    %1268 = vmatpush.msra.mxu0 %v1029
    %1269 = vmatpush.msra.mxu0 %v1005
    %1270 = vmatmul.f32.gmra.mxu0 %v1152
    %v1271 = vpop.f32.mrf.mxu0
    %v1272 = vadd.f32 %v1107, %v1271
    %1273 = vdwg.mxu0
    %1274 = vmatpush.msra.mxu0 0.0
    %1275 = vmatpush.msra.mxu0 0.0
    %1276 = vmatpush.msra.mxu0 0.0
    %1277 = vmatpush.msra.mxu0 0.0
    %1278 = vmatpush.msra.mxu0 0.0
    %1279 = vmatpush.msra.mxu0 0.0
    %1280 = vmatpush.msra.mxu0 0.0
    %1281 = vmatpush.msra.mxu0 0.0
    %1282 = vmatpush.msra.mxu0 0.0
    %1283 = vmatpush.msra.mxu0 0.0
    %1284 = vmatpush.msra.mxu0 0.0
    %1285 = vmatpush.msra.mxu0 0.0
    %1286 = vmatpush.msra.mxu0 %v1078
    %1287 = vmatpush.msra.mxu0 %v1054
    %1288 = vmatpush.msra.mxu0 %v1030
    %1289 = vmatpush.msra.mxu0 %v1006
    %1290 = vmatmul.f32.gmra.mxu0 %v1152
    %v1291 = vpop.f32.mrf.mxu0
    %v1292 = vadd.f32 %v1108, %v1291
    %1293 = vdwg.mxu0
    %1294 = vmatpush.msra.mxu0 0.0
    %1295 = vmatpush.msra.mxu0 0.0
    %1296 = vmatpush.msra.mxu0 0.0
    %1297 = vmatpush.msra.mxu0 0.0
    %1298 = vmatpush.msra.mxu0 0.0
    %1299 = vmatpush.msra.mxu0 0.0
    %1300 = vmatpush.msra.mxu0 0.0
    %1301 = vmatpush.msra.mxu0 0.0
    %1302 = vmatpush.msra.mxu0 0.0
    %1303 = vmatpush.msra.mxu0 0.0
    %1304 = vmatpush.msra.mxu0 0.0
    %1305 = vmatpush.msra.mxu0 0.0
    %1306 = vmatpush.msra.mxu0 %v1079
    %1307 = vmatpush.msra.mxu0 %v1055
    %1308 = vmatpush.msra.mxu0 %v1031
    %1309 = vmatpush.msra.mxu0 %v1007
    %1310 = vmatmul.f32.gmra.mxu0 %v1152
    %v1311 = vpop.f32.mrf.mxu0
    %v1312 = vadd.f32 %v1109, %v1311
    %1313 = vdwg.mxu0
    %1314 = vmatpush.msra.mxu0 0.0
    %1315 = vmatpush.msra.mxu0 0.0
    %1316 = vmatpush.msra.mxu0 0.0
    %1317 = vmatpush.msra.mxu0 0.0
    %1318 = vmatpush.msra.mxu0 0.0
    %1319 = vmatpush.msra.mxu0 0.0
    %1320 = vmatpush.msra.mxu0 0.0
    %1321 = vmatpush.msra.mxu0 0.0
    %1322 = vmatpush.msra.mxu0 0.0
    %1323 = vmatpush.msra.mxu0 0.0
    %1324 = vmatpush.msra.mxu0 0.0
    %1325 = vmatpush.msra.mxu0 0.0
    %1326 = vmatpush.msra.mxu0 %v1080
    %1327 = vmatpush.msra.mxu0 %v1056
    %1328 = vmatpush.msra.mxu0 %v1032
    %1329 = vmatpush.msra.mxu0 %v1008
    %1330 = vmatmul.f32.gmra.mxu0 %v1152
    %v1331 = vpop.f32.mrf.mxu0
    %v1332 = vadd.f32 %v1110, %v1331
    %1333 = vdwg.mxu0
    %1334 = vmatpush.msra.mxu0 0.0
    %1335 = vmatpush.msra.mxu0 0.0
    %1336 = vmatpush.msra.mxu0 0.0
    %1337 = vmatpush.msra.mxu0 0.0
    %1338 = vmatpush.msra.mxu0 0.0
    %1339 = vmatpush.msra.mxu0 0.0
    %1340 = vmatpush.msra.mxu0 0.0
    %1341 = vmatpush.msra.mxu0 0.0
    %1342 = vmatpush.msra.mxu0 0.0
    %1343 = vmatpush.msra.mxu0 0.0
    %1344 = vmatpush.msra.mxu0 0.0
    %1345 = vmatpush.msra.mxu0 0.0
    %1346 = vmatpush.msra.mxu0 %v1081
    %1347 = vmatpush.msra.mxu0 %v1057
    %1348 = vmatpush.msra.mxu0 %v1033
    %1349 = vmatpush.msra.mxu0 %v1009
    %1350 = vmatmul.f32.gmra.mxu0 %v1152
    %v1351 = vpop.f32.mrf.mxu0
    %v1352 = vadd.f32 %v1111, %v1351
    %1353 = vdwg.mxu0
    %1354 = vmatpush.msra.mxu0 0.0
    %1355 = vmatpush.msra.mxu0 0.0
    %1356 = vmatpush.msra.mxu0 0.0
    %1357 = vmatpush.msra.mxu0 0.0
    %1358 = vmatpush.msra.mxu0 0.0
    %1359 = vmatpush.msra.mxu0 0.0
    %1360 = vmatpush.msra.mxu0 0.0
    %1361 = vmatpush.msra.mxu0 0.0
    %1362 = vmatpush.msra.mxu0 0.0
    %1363 = vmatpush.msra.mxu0 0.0
    %1364 = vmatpush.msra.mxu0 0.0
    %1365 = vmatpush.msra.mxu0 0.0
    %1366 = vmatpush.msra.mxu0 %v1082
    %1367 = vmatpush.msra.mxu0 %v1058
    %1368 = vmatpush.msra.mxu0 %v1034
    %1369 = vmatpush.msra.mxu0 %v1010
    %1370 = vmatmul.f32.gmra.mxu0 %v1152
    %v1371 = vpop.f32.mrf.mxu0
    %v1372 = vadd.f32 %v1112, %v1371
    %1373 = vdwg.mxu0
    %1374 = vmatpush.msra.mxu0 0.0
    %1375 = vmatpush.msra.mxu0 0.0
    %1376 = vmatpush.msra.mxu0 0.0
    %1377 = vmatpush.msra.mxu0 0.0
    %1378 = vmatpush.msra.mxu0 0.0
    %1379 = vmatpush.msra.mxu0 0.0
    %1380 = vmatpush.msra.mxu0 0.0
    %1381 = vmatpush.msra.mxu0 0.0
    %1382 = vmatpush.msra.mxu0 0.0
    %1383 = vmatpush.msra.mxu0 0.0
    %1384 = vmatpush.msra.mxu0 0.0
    %1385 = vmatpush.msra.mxu0 0.0
    %1386 = vmatpush.msra.mxu0 %v1083
    %1387 = vmatpush.msra.mxu0 %v1059
    %1388 = vmatpush.msra.mxu0 %v1035
    %1389 = vmatpush.msra.mxu0 %v1011
    %1390 = vmatmul.f32.gmra.mxu0 %v1152
    %v1391 = vpop.f32.mrf.mxu0
    %v1392 = vadd.f32 %v1113, %v1391
    %1393 = vdwg.mxu0
    %1394 = vmatpush.msra.mxu0 0.0
    %1395 = vmatpush.msra.mxu0 0.0
    %1396 = vmatpush.msra.mxu0 0.0
    %1397 = vmatpush.msra.mxu0 0.0
    %1398 = vmatpush.msra.mxu0 0.0
    %1399 = vmatpush.msra.mxu0 0.0
    %1400 = vmatpush.msra.mxu0 0.0
    %1401 = vmatpush.msra.mxu0 0.0
    %1402 = vmatpush.msra.mxu0 0.0
    %1403 = vmatpush.msra.mxu0 0.0
    %1404 = vmatpush.msra.mxu0 0.0
    %1405 = vmatpush.msra.mxu0 0.0
    %1406 = vmatpush.msra.mxu0 %v1084
    %1407 = vmatpush.msra.mxu0 %v1060
    %1408 = vmatpush.msra.mxu0 %v1036
    %1409 = vmatpush.msra.mxu0 %v1012
    %1410 = vmatmul.f32.gmra.mxu0 %v1152
    %v1411 = vpop.f32.mrf.mxu0
    %v1412 = vadd.f32 %v1114, %v1411
    %1413 = vdwg.mxu0
    %1414 = vmatpush.msra.mxu0 0.0
    %1415 = vmatpush.msra.mxu0 0.0
    %1416 = vmatpush.msra.mxu0 0.0
    %1417 = vmatpush.msra.mxu0 0.0
    %1418 = vmatpush.msra.mxu0 0.0
    %1419 = vmatpush.msra.mxu0 0.0
    %1420 = vmatpush.msra.mxu0 0.0
    %1421 = vmatpush.msra.mxu0 0.0
    %1422 = vmatpush.msra.mxu0 0.0
    %1423 = vmatpush.msra.mxu0 0.0
    %1424 = vmatpush.msra.mxu0 0.0
    %1425 = vmatpush.msra.mxu0 0.0
    %1426 = vmatpush.msra.mxu0 %v1085
    %1427 = vmatpush.msra.mxu0 %v1061
    %1428 = vmatpush.msra.mxu0 %v1037
    %1429 = vmatpush.msra.mxu0 %v1013
    %1430 = vmatmul.f32.gmra.mxu0 %v1152
    %v1431 = vpop.f32.mrf.mxu0
    %v1432 = vadd.f32 %v1115, %v1431
    %1433 = vdwg.mxu0
    %1434 = vmatpush.msra.mxu0 0.0
    %1435 = vmatpush.msra.mxu0 0.0
    %1436 = vmatpush.msra.mxu0 0.0
    %1437 = vmatpush.msra.mxu0 0.0
    %1438 = vmatpush.msra.mxu0 0.0
    %1439 = vmatpush.msra.mxu0 0.0
    %1440 = vmatpush.msra.mxu0 0.0
    %1441 = vmatpush.msra.mxu0 0.0
    %1442 = vmatpush.msra.mxu0 0.0
    %1443 = vmatpush.msra.mxu0 0.0
    %1444 = vmatpush.msra.mxu0 0.0
    %1445 = vmatpush.msra.mxu0 0.0
    %1446 = vmatpush.msra.mxu0 %v1086
    %1447 = vmatpush.msra.mxu0 %v1062
    %1448 = vmatpush.msra.mxu0 %v1038
    %1449 = vmatpush.msra.mxu0 %v1014
    %1450 = vmatmul.f32.gmra.mxu0 %v1152
    %v1451 = vpop.f32.mrf.mxu0
    %v1452 = vadd.f32 %v1116, %v1451
    %1453 = vdwg.mxu0
    %1454 = vmatpush.msra.mxu0 0.0
    %1455 = vmatpush.msra.mxu0 0.0
    %1456 = vmatpush.msra.mxu0 0.0
    %1457 = vmatpush.msra.mxu0 0.0
    %1458 = vmatpush.msra.mxu0 0.0
    %1459 = vmatpush.msra.mxu0 0.0
    %1460 = vmatpush.msra.mxu0 0.0
    %1461 = vmatpush.msra.mxu0 0.0
    %1462 = vmatpush.msra.mxu0 0.0
    %1463 = vmatpush.msra.mxu0 0.0
    %1464 = vmatpush.msra.mxu0 0.0
    %1465 = vmatpush.msra.mxu0 0.0
    %1466 = vmatpush.msra.mxu0 %v1087
    %1467 = vmatpush.msra.mxu0 %v1063
    %1468 = vmatpush.msra.mxu0 %v1039
    %1469 = vmatpush.msra.mxu0 %v1015
    %1470 = vmatmul.f32.gmra.mxu0 %v1152
    %v1471 = vpop.f32.mrf.mxu0
    %v1472 = vadd.f32 %v1117, %v1471
    %1473 = vdwg.mxu0
    %1474 = vmatpush.msra.mxu0 0.0
    %1475 = vmatpush.msra.mxu0 0.0
    %1476 = vmatpush.msra.mxu0 0.0
    %1477 = vmatpush.msra.mxu0 0.0
    %1478 = vmatpush.msra.mxu0 0.0
    %1479 = vmatpush.msra.mxu0 0.0
    %1480 = vmatpush.msra.mxu0 0.0
    %1481 = vmatpush.msra.mxu0 0.0
    %1482 = vmatpush.msra.mxu0 0.0
    %1483 = vmatpush.msra.mxu0 0.0
    %1484 = vmatpush.msra.mxu0 0.0
    %1485 = vmatpush.msra.mxu0 0.0
    %1486 = vmatpush.msra.mxu0 %v1088
    %1487 = vmatpush.msra.mxu0 %v1064
    %1488 = vmatpush.msra.mxu0 %v1040
    %1489 = vmatpush.msra.mxu0 %v1016
    %1490 = vmatmul.f32.gmra.mxu0 %v1152
    %v1491 = vpop.f32.mrf.mxu0
    %v1492 = vadd.f32 %v1118, %v1491
    %1493 = vdwg.mxu0
    %1494 = vmatpush.msra.mxu0 0.0
    %1495 = vmatpush.msra.mxu0 0.0
    %1496 = vmatpush.msra.mxu0 0.0
    %1497 = vmatpush.msra.mxu0 0.0
    %1498 = vmatpush.msra.mxu0 0.0
    %1499 = vmatpush.msra.mxu0 0.0
    %1500 = vmatpush.msra.mxu0 0.0
    %1501 = vmatpush.msra.mxu0 0.0
    %1502 = vmatpush.msra.mxu0 0.0
    %1503 = vmatpush.msra.mxu0 0.0
    %1504 = vmatpush.msra.mxu0 0.0
    %1505 = vmatpush.msra.mxu0 0.0
    %1506 = vmatpush.msra.mxu0 %v1089
    %1507 = vmatpush.msra.mxu0 %v1065
    %1508 = vmatpush.msra.mxu0 %v1041
    %1509 = vmatpush.msra.mxu0 %v1017
    %1510 = vmatmul.f32.gmra.mxu0 %v1152
    %v1511 = vpop.f32.mrf.mxu0
    %v1512 = vadd.f32 %v1119, %v1511
    %1513 = vdwg.mxu0
    %1514 = vmatpush.msra.mxu0 0.0
    %1515 = vmatpush.msra.mxu0 0.0
    %1516 = vmatpush.msra.mxu0 0.0
    %1517 = vmatpush.msra.mxu0 0.0
    %1518 = vmatpush.msra.mxu0 0.0
    %1519 = vmatpush.msra.mxu0 0.0
    %1520 = vmatpush.msra.mxu0 0.0
    %1521 = vmatpush.msra.mxu0 0.0
    %1522 = vmatpush.msra.mxu0 0.0
    %1523 = vmatpush.msra.mxu0 0.0
    %1524 = vmatpush.msra.mxu0 0.0
    %1525 = vmatpush.msra.mxu0 0.0
    %1526 = vmatpush.msra.mxu0 %v1090
    %1527 = vmatpush.msra.mxu0 %v1066
    %1528 = vmatpush.msra.mxu0 %v1042
    %1529 = vmatpush.msra.mxu0 %v1018
    %1530 = vmatmul.f32.gmra.mxu0 %v1152
    %v1531 = vpop.f32.mrf.mxu0
    %v1532 = vadd.f32 %v1120, %v1531
    %1533 = vdwg.mxu0
    %1534 = vmatpush.msra.mxu0 0.0
    %1535 = vmatpush.msra.mxu0 0.0
    %1536 = vmatpush.msra.mxu0 0.0
    %1537 = vmatpush.msra.mxu0 0.0
    %1538 = vmatpush.msra.mxu0 0.0
    %1539 = vmatpush.msra.mxu0 0.0
    %1540 = vmatpush.msra.mxu0 0.0
    %1541 = vmatpush.msra.mxu0 0.0
    %1542 = vmatpush.msra.mxu0 0.0
    %1543 = vmatpush.msra.mxu0 0.0
    %1544 = vmatpush.msra.mxu0 0.0
    %1545 = vmatpush.msra.mxu0 0.0
    %1546 = vmatpush.msra.mxu0 %v1091
    %1547 = vmatpush.msra.mxu0 %v1067
    %1548 = vmatpush.msra.mxu0 %v1043
    %1549 = vmatpush.msra.mxu0 %v1019
    %1550 = vmatmul.f32.gmra.mxu0 %v1152
    %v1551 = vpop.f32.mrf.mxu0
    %v1552 = vadd.f32 %v1121, %v1551
    %1553 = vdwg.mxu0
    %1554 = vmatpush.msra.mxu0 0.0
    %1555 = vmatpush.msra.mxu0 0.0
    %1556 = vmatpush.msra.mxu0 0.0
    %1557 = vmatpush.msra.mxu0 0.0
    %1558 = vmatpush.msra.mxu0 0.0
    %1559 = vmatpush.msra.mxu0 0.0
    %1560 = vmatpush.msra.mxu0 0.0
    %1561 = vmatpush.msra.mxu0 0.0
    %1562 = vmatpush.msra.mxu0 0.0
    %1563 = vmatpush.msra.mxu0 0.0
    %1564 = vmatpush.msra.mxu0 0.0
    %1565 = vmatpush.msra.mxu0 0.0
    %1566 = vmatpush.msra.mxu0 %v1092
    %1567 = vmatpush.msra.mxu0 %v1068
    %1568 = vmatpush.msra.mxu0 %v1044
    %1569 = vmatpush.msra.mxu0 %v1020
    %1570 = vmatmul.f32.gmra.mxu0 %v1152
    %v1571 = vpop.f32.mrf.mxu0
    %v1572 = vadd.f32 %v1122, %v1571
    %1573 = vdwg.mxu0
    %1574 = vmatpush.msra.mxu0 0.0
    %1575 = vmatpush.msra.mxu0 0.0
    %1576 = vmatpush.msra.mxu0 0.0
    %1577 = vmatpush.msra.mxu0 0.0
    %1578 = vmatpush.msra.mxu0 0.0
    %1579 = vmatpush.msra.mxu0 0.0
    %1580 = vmatpush.msra.mxu0 0.0
    %1581 = vmatpush.msra.mxu0 0.0
    %1582 = vmatpush.msra.mxu0 0.0
    %1583 = vmatpush.msra.mxu0 0.0
    %1584 = vmatpush.msra.mxu0 0.0
    %1585 = vmatpush.msra.mxu0 0.0
    %1586 = vmatpush.msra.mxu0 %v1093
    %1587 = vmatpush.msra.mxu0 %v1069
    %1588 = vmatpush.msra.mxu0 %v1045
    %1589 = vmatpush.msra.mxu0 %v1021
    %1590 = vmatmul.f32.gmra.mxu0 %v1152
    %v1591 = vpop.f32.mrf.mxu0
    %v1592 = vadd.f32 %v1123, %v1591
    %1593 = vdwg.mxu0
    %1594 = vmatpush.msra.mxu0 0.0
    %1595 = vmatpush.msra.mxu0 0.0
    %1596 = vmatpush.msra.mxu0 0.0
    %1597 = vmatpush.msra.mxu0 0.0
    %1598 = vmatpush.msra.mxu0 0.0
    %1599 = vmatpush.msra.mxu0 0.0
    %1600 = vmatpush.msra.mxu0 0.0
    %1601 = vmatpush.msra.mxu0 0.0
    %1602 = vmatpush.msra.mxu0 0.0
    %1603 = vmatpush.msra.mxu0 0.0
    %1604 = vmatpush.msra.mxu0 0.0
    %1605 = vmatpush.msra.mxu0 0.0
    %1606 = vmatpush.msra.mxu0 %v1094
    %1607 = vmatpush.msra.mxu0 %v1070
    %1608 = vmatpush.msra.mxu0 %v1046
    %1609 = vmatpush.msra.mxu0 %v1022
    %1610 = vmatmul.f32.gmra.mxu0 %v1152
    %v1611 = vpop.f32.mrf.mxu0
    %v1612 = vadd.f32 %v1124, %v1611
    %1613 = vdwg.mxu0
    %1614 = vmatpush.msra.mxu0 0.0
    %1615 = vmatpush.msra.mxu0 0.0
    %1616 = vmatpush.msra.mxu0 0.0
    %1617 = vmatpush.msra.mxu0 0.0
    %1618 = vmatpush.msra.mxu0 0.0
    %1619 = vmatpush.msra.mxu0 0.0
    %1620 = vmatpush.msra.mxu0 0.0
    %1621 = vmatpush.msra.mxu0 0.0
    %1622 = vmatpush.msra.mxu0 0.0
    %1623 = vmatpush.msra.mxu0 0.0
    %1624 = vmatpush.msra.mxu0 0.0
    %1625 = vmatpush.msra.mxu0 0.0
    %1626 = vmatpush.msra.mxu0 %v1095
    %1627 = vmatpush.msra.mxu0 %v1071
    %1628 = vmatpush.msra.mxu0 %v1047
    %1629 = vmatpush.msra.mxu0 %v1023
    %1630 = vmatmul.f32.gmra.mxu0 %v1152
    %v1631 = vpop.f32.mrf.mxu0
    %v1632 = vadd.f32 %v1125, %v1631
    %1633 = vdwg.mxu0
    %v1658 = vrot.slane %v1192, 6
    %v1659 = vrot.slane %v1212, 4
    %v1660 = vrot.slane %v1232, 2
    %v1661 = vrot.slane %v1272, 6
    %v1662 = vrot.slane %v1292, 4
    %v1663 = vrot.slane %v1312, 2
    %v1664 = vrot.slane %v1352, 6
    %v1665 = vrot.slane %v1372, 4
    %v1666 = vrot.slane %v1392, 2
    %v1667 = vrot.slane %v1432, 6
    %v1668 = vrot.slane %v1452, 4
    %v1669 = vrot.slane %v1472, 2
    %v1670 = vrot.slane %v1512, 6
    %v1671 = vrot.slane %v1532, 4
    %v1672 = vrot.slane %v1552, 2
    %v1673 = vrot.slane %v1592, 6
    %v1674 = vrot.slane %v1612, 4
    %v1675 = vrot.slane %v1632, 2
    %vm1676 = vcmask 1041408
    %v1677 = vsel %vm1676, %v1172, %v1658
    %vm1678 = vcmask 1045508
    %v1679 = vsel %vm1678, %v1659, %v1660
    %vm1680 = vcmask 1043456
    %v1681 = vsel %vm1680, %v1677, %v1679
    %v1682 = vsel %vm1676, %v1252, %v1661
    %v1683 = vsel %vm1678, %v1662, %v1663
    %v1684 = vsel %vm1680, %v1682, %v1683
    %v1685 = vsel %vm1676, %v1332, %v1664
    %v1686 = vsel %vm1678, %v1665, %v1666
    %v1687 = vsel %vm1680, %v1685, %v1686
    %v1688 = vsel %vm1676, %v1412, %v1667
    %v1689 = vsel %vm1678, %v1668, %v1669
    %v1690 = vsel %vm1680, %v1688, %v1689
    %v1691 = vsel %vm1676, %v1492, %v1670
    %v1692 = vsel %vm1678, %v1671, %v1672
    %v1693 = vsel %vm1680, %v1691, %v1692
    %v1694 = vsel %vm1676, %v1572, %v1673
    %v1695 = vsel %vm1678, %v1674, %v1675
    %v1696 = vsel %vm1680, %v1694, %v1695
    %1703 = vst [vmem:[#allocation2] sm:$0xff] %v1681
    %1704 = vst [vmem:[#allocation2 + $0x8] sm:$0xff] %v1684
    %1705 = vst [vmem:[#allocation2 + $0x10] sm:$0xff] %v1687
    %1706 = vst [vmem:[#allocation2 + $0x18] sm:$0xff] %v1690
    %1707 = vst [vmem:[#allocation2 + $0x20] sm:$0xff] %v1693
    %1708 = vst [vmem:[#allocation2 + $0x28] sm:$0xff] %v1696
    // Predicated region
    $region30: #{tpu_custom_call.1} parent=1 // pred_check
      _
    $region31: #{tpu_custom_call.1} parent=1 // pred_check_branch
      %1710 = sbr.rel (0) target = $region33
    $region32: #{tpu_custom_call.1} parent=1 // pred_region
      %1712 = vsyncadd [#allocation3], 0
      %s1714 = sshll.u32 [#allocation2], 4
      %s1715 = int_to_ptr.vmem [resolvable:$true] %s1714
      %s1716 = sshll.u32 %s7, 4
      %s1717 = int_to_ptr.hbm [resolvable:$true] %s1716
      %1719 = dma.vmem_to_hbm [thread:$0]  %s1715, 768, %s1717, [#allocation3]
    $region33: #{tpu_custom_call.1} parent=1 // pred_fallthru
      _
    // Predicated region
    $region34: #{tpu_custom_call.1} parent=1 // pred_check
      _
    $region35: #{tpu_custom_call.1} parent=1 // pred_check_branch
      %1721 = sbr.rel (0) target = $region37
    $region36: #{tpu_custom_call.1} parent=1 // pred_region
      %1723 = dma.done [#allocation3], 768
    $region37: #{tpu_custom_call.1} parent=1 // pred_fallthru
      _
    %1724 = vsyncpa [#allocation3], 1

</llo_original>
